<compile_context>
chip_gen: v7x
topology: tpu7x:2x2x1
jax: 0.10.0
libtpu: 0.0.40
codegen_flags: <defaults>
</compile_context>

<pallas_src>
import numpy as np
import jax
import jax.numpy as jnp
from jax.experimental import pallas as pl
from jax.experimental.pallas import tpu as pltpu


# ----------------------------------------------------------------------------
# Pallas kernel: whole forward pass for one tile of `tb` samples.
# ----------------------------------------------------------------------------
def _cnn_kernel(x_ref, oh_ref,
                a1_ref, b1p_ref, a2_ref, b2_ref,
                w1a_ref, ew1b_ref, w2_ref, fb2_ref, w3_ref, fb3_ref,
                out_ref):
    f32, bf16 = jnp.float32, jnp.bfloat16
    dot = lambda a, b: jnp.dot(a, b, preferred_element_type=f32)

    # conv1 with the 2x2/2 max-pool folded in (host-side): single
    # [tb,256]x[256,512] matmul; the four pooling candidates sit in
    # 128-lane-aligned column chunks (free slices, no XLU work).
    z = dot(x_ref[...], a1_ref[...])                           # [tb, 512] f32
    m4 = jnp.maximum(jnp.maximum(z[:, 0:128], z[:, 128:256]),
                     jnp.maximum(z[:, 256:384], z[:, 384:512]))
    pool = jnp.maximum(m4 + b1p_ref[...], 0.0)                 # [tb, 128]

    # conv2 (Toeplitz matmul) + bias + ReLU                     [tb, 256]
    r2 = jnp.maximum(dot(pool.astype(bf16), a2_ref[...]) + b2_ref[...], 0.0)

    # fc1 + ReLU; embedding table AND fc1 bias folded into the one-hot slice
    h1 = jnp.maximum(dot(r2.astype(bf16), w1a_ref[...])
                     + dot(oh_ref[...], ew1b_ref[...]), 0.0)   # [tb, 256]
    # fc2 + ReLU                                                [tb, 128]
    h2 = jnp.maximum(dot(h1.astype(bf16), w2_ref[...]) + fb2_ref[...], 0.0)
    # fc3 (no activation)                                       [tb, 128]
    out_ref[...] = (dot(h2.astype(bf16), w3_ref[...]) + fb3_ref[...]
                    ).astype(out_ref.dtype)


# ----------------------------------------------------------------------------
# Host-side (one-time) weight repacking.  Exact reformulation:
#   conv -> Toeplitz matmul matrices, maxpool folded into conv1 (column
#   selection + shared per-channel bias), embedding + fc1 bias folded into the
#   one-hot slice of fc1.  Everything zero-padded to lane-friendly shapes and
#   cast to bf16 (weights) / f32 (biases).
# ----------------------------------------------------------------------------
def _pad_to(a, rows, cols, dtype=jnp.float32):
    a = jnp.asarray(a, jnp.float32)
    a = jnp.pad(a, ((0, rows - a.shape[0]), (0, cols - a.shape[1])))
    return a.astype(dtype)


def _build_operands(p):
    bf16 = jnp.bfloat16

    # conv1: board[22,10] (flat 220) -> 4ch x 19 x 7 (flat 532, channel-major)
    P1 = np.zeros((220, 133, 16), np.float32)
    for y in range(19):
        for x in range(7):
            for dy in range(4):
                for dx in range(4):
                    P1[(y + dy) * 10 + (x + dx), y * 7 + x, dy * 4 + dx] = 1.0
    a1 = jnp.einsum("ipk,ck->icp", jnp.asarray(P1),
                    p["conv1_w"].reshape(4, 16)).reshape(220, 532)

    # Fold MaxPool2d(2,2): each pooling candidate (u,v) is a pure column
    # selection of a1 -> [220,108]; pad to 128 lanes and concat -> [220,512].
    def pool_cols(u, v):
        return np.array([c * 133 + (2 * py + u) * 7 + (2 * px + v)
                         for c in range(4) for py in range(9) for px in range(3)],
                        np.int32)
    chunks = []
    for u in range(2):
        for v in range(2):
            a1_uv = a1[:, pool_cols(u, v)]                      # [220, 108]
            chunks.append(jnp.pad(a1_uv, ((0, 0), (0, 20))))    # -> [220, 128]
    a1_cat = jnp.concatenate(chunks, axis=1)                    # [220, 512]
    b1p = jnp.repeat(p["conv1_b"], 27).reshape(1, 108)          # shared pooled bias

    # conv2: 4 x 9 x 3 (108) -> 16 x 8 x 2 (flat 256, == torch.flatten order)
    P2 = np.zeros((108, 16, 16), np.float32)
    for y in range(8):
        for x in range(2):
            for ci in range(4):
                for dy in range(2):
                    for dx in range(2):
                        P2[ci * 27 + (y + dy) * 3 + (x + dx), y * 2 + x,
                           ci * 4 + dy * 2 + dx] = 1.0
    a2 = jnp.einsum("spk,ck->scp", jnp.asarray(P2),
                    p["conv2_w"].reshape(16, 16)).reshape(108, 256)
    b2 = jnp.repeat(p["conv2_b"], 16).reshape(1, 256)

    # fc layers; embedding table + fc1 bias folded into the one-hot slice
    # (exact: the one-hot row sums to 1 for valid piece ids 1..7).
    w1a = p["fc1_w"][:256, :]                                   # board feats -> fc1
    ew1b = p["emb"] @ p["fc1_w"][256:, :] + p["fc1_b"][None, :] # [7, 130]
    w2, fb2 = p["fc2_w"], p["fc2_b"].reshape(1, -1)
    w3, fb3 = p["fc3_w"], p["fc3_b"].reshape(1, -1)

    return (
        _pad_to(a1_cat, 256, 512, bf16), _pad_to(b1p, 1, 128),
        _pad_to(a2, 128, 256, bf16),     _pad_to(b2, 1, 256),
        _pad_to(w1a, 256, 256, bf16),    _pad_to(ew1b, 8, 256, bf16),
        _pad_to(w2, 256, 128, bf16),     _pad_to(fb2, 1, 128),
        _pad_to(w3, 128, 128, bf16),     _pad_to(fb3, 1, 128),
    )


def _round_up(x, m):
    return (x + m - 1) // m * m


def cnn_forward(board, piece, params, block_rows=256):
    """board: [B, 1, 22, 10] f32; piece: [B] int (values 1..7) -> [B, 48]."""
    B = board.shape[0]
    operands = _build_operands(params)

    x = jnp.pad(board.reshape(B, 220).astype(jnp.float32),
                ((0, 0), (0, 36))).astype(jnp.bfloat16)          # [B, 256] bf16
    mino = piece.astype(jnp.int32).reshape(B, 1) - 1
    onehot = (mino == jnp.arange(8, dtype=jnp.int32)[None, :]
              ).astype(jnp.bfloat16)                              # [B, 8] bf16

    tb = _round_up(min(int(block_rows), B), 8)      # batch tile (rows, mult of 8)
    m = _round_up(B, tb)
    if m != B:
        x = jnp.pad(x, ((0, m - B), (0, 0)))
        onehot = jnp.pad(onehot, ((0, m - B), (0, 0)))   # padded rows -> zeros

    const = lambda a: pl.BlockSpec(a.shape, lambda i: (0, 0))     # VMEM-resident
    out = pl.pallas_call(
        _cnn_kernel,
        out_shape=jax.ShapeDtypeStruct((m, 128), jnp.float32),
        grid=(m // tb,),
        in_specs=[pl.BlockSpec((tb, 256), lambda i: (i, 0)),      # board features
                  pl.BlockSpec((tb, 8), lambda i: (i, 0))]        # piece one-hot
                 + [const(a) for a in operands],
        out_specs=pl.BlockSpec((tb, 128), lambda i: (i, 0)),      # lane-dense out
        compiler_params=pltpu.CompilerParams(
            dimension_semantics=("parallel",),          # megacore sharding on v7x
            vmem_limit_bytes=32 * 1024 * 1024),
    )(x, onehot, *operands)
    return out[:B, :48]


# ----------------------------------------------------------------------------
# Pure-JAX reference that mirrors the PyTorch module op-for-op (f32).
# ----------------------------------------------------------------------------
def reference_forward(board, piece, p):
    hp = jax.lax.Precision.HIGHEST
    z1 = jax.lax.conv_general_dilated(
        board, p["conv1_w"], (1, 1), "VALID",
        dimension_numbers=("NCHW", "OIHW", "NCHW"), precision=hp)
    z1 = z1 + p["conv1_b"][None, :, None, None]
    r1 = jnp.maximum(z1, 0.0)
    pool = jax.lax.reduce_window(r1, -jnp.inf, jax.lax.max,
                                 (1, 1, 2, 2), (1, 1, 2, 2), "VALID")
    z2 = jax.lax.conv_general_dilated(
        pool, p["conv2_w"], (1, 1), "VALID",
        dimension_numbers=("NCHW", "OIHW", "NCHW"), precision=hp)
    z2 = z2 + p["conv2_b"][None, :, None, None]
    r2 = jnp.maximum(z2, 0.0)
    flat = r2.reshape(r2.shape[0], -1)                         # [B, 256]
    emb = p["emb"][piece - 1]                                  # [B, 5]
    combined = jnp.concatenate([flat, emb], axis=1)            # [B, 261]
    h1 = jnp.maximum(jnp.dot(combined, p["fc1_w"], precision=hp) + p["fc1_b"], 0.0)
    h2 = jnp.maximum(jnp.dot(h1, p["fc2_w"], precision=hp) + p["fc2_b"], 0.0)
    return jnp.dot(h2, p["fc3_w"], precision=hp) + p["fc3_b"]


def init_params(key):
    ks = jax.random.split(key, 11)
    def u(k, shape, fan_in):
        lim = 1.0 / float(np.sqrt(fan_in))
        return jax.random.uniform(k, shape, jnp.float32, -lim, lim)
    return dict(
        conv1_w=u(ks[0], (4, 1, 4, 4), 16), conv1_b=u(ks[1], (4,), 16),
        conv2_w=u(ks[2], (16, 4, 2, 2), 16), conv2_b=u(ks[3], (16,), 16),
        emb=jax.random.normal(ks[4], (7, 5), jnp.float32),
        fc1_w=u(ks[5], (261, 130), 261), fc1_b=u(ks[6], (130,), 261),
        fc2_w=u(ks[7], (130, 65), 130), fc2_b=u(ks[8], (65,), 130),
        fc3_w=u(ks[9], (65, 48), 65), fc3_b=u(ks[10], (48,), 65),
    )


if __name__ == "__main__":
    B = 16
    key = jax.random.PRNGKey(0)
    k_board, k_piece, k_params = jax.random.split(key, 3)

    board = jax.random.normal(k_board, (B, 1, 22, 10), jnp.float32)
    piece = jax.random.randint(k_piece, (B,), 1, 8, dtype=jnp.int32)
    params = init_params(k_params)

    # block_rows=8 -> grid of 2 batch tiles (exercises pipelining and gives the
    # v7x "parallel" axis an even number of tiles to shard).
    out = cnn_forward(board, piece, params, block_rows=8)
    jax.block_until_ready(out)

    ref = reference_forward(board, piece, params)
    assert out.shape == (B, 48)
    err = float(jnp.max(jnp.abs(out - ref)))
    # Kernel matmuls use bf16 MXU inputs with f32 accumulation -> tolerance is
    # loosened vs. the exact-f32 variant.
    assert jnp.allclose(out, ref, atol=2e-2, rtol=2e-2), f"max abs err {err}"

    print("KERNEL_OK")
</pallas_src>

<mosaic_0001>
module attributes {stable_mosaic.version = 11 : i64} {
  func.func @_cnn_kernel(%arg0: i32, %arg1: memref<8x256xbf16, #tpu.memory_space<vmem>>, %arg2: memref<8x8xbf16, #tpu.memory_space<vmem>>, %arg3: memref<256x512xbf16, #tpu.memory_space<vmem>>, %arg4: memref<1x128xf32, #tpu.memory_space<vmem>>, %arg5: memref<128x256xbf16, #tpu.memory_space<vmem>>, %arg6: memref<1x256xf32, #tpu.memory_space<vmem>>, %arg7: memref<256x256xbf16, #tpu.memory_space<vmem>>, %arg8: memref<8x256xbf16, #tpu.memory_space<vmem>>, %arg9: memref<256x128xbf16, #tpu.memory_space<vmem>>, %arg10: memref<1x128xf32, #tpu.memory_space<vmem>>, %arg11: memref<128x128xbf16, #tpu.memory_space<vmem>>, %arg12: memref<1x128xf32, #tpu.memory_space<vmem>>, %arg13: memref<8x128xf32, #tpu.memory_space<vmem>>) attributes {dimension_semantics = [#tpu.dimension_semantics<parallel>], iteration_bounds = array<i64: 2>, scalar_prefetch = 0 : i64, scratch_operands = 0 : i64, tpu.core_type = #tpu.core_type<tc>, window_params = [{transform_indices = @transform_0, window_bounds = array<i64: 8, 256>}, {transform_indices = @transform_1, window_bounds = array<i64: 8, 8>}, {pipeline_mode = #tpu.pipeline_mode<synchronous>, transform_indices = @transform_2, window_bounds = array<i64: 256, 512>}, {pipeline_mode = #tpu.pipeline_mode<synchronous>, transform_indices = @transform_3, window_bounds = array<i64: 1, 128>}, {pipeline_mode = #tpu.pipeline_mode<synchronous>, transform_indices = @transform_4, window_bounds = array<i64: 128, 256>}, {pipeline_mode = #tpu.pipeline_mode<synchronous>, transform_indices = @transform_5, window_bounds = array<i64: 1, 256>}, {pipeline_mode = #tpu.pipeline_mode<synchronous>, transform_indices = @transform_6, window_bounds = array<i64: 256, 256>}, {pipeline_mode = #tpu.pipeline_mode<synchronous>, transform_indices = @transform_7, window_bounds = array<i64: 8, 256>}, {pipeline_mode = #tpu.pipeline_mode<synchronous>, transform_indices = @transform_8, window_bounds = array<i64: 256, 128>}, {pipeline_mode = #tpu.pipeline_mode<synchronous>, transform_indices = @transform_9, window_bounds = array<i64: 1, 128>}, {pipeline_mode = #tpu.pipeline_mode<synchronous>, transform_indices = @transform_10, window_bounds = array<i64: 128, 128>}, {pipeline_mode = #tpu.pipeline_mode<synchronous>, transform_indices = @transform_11, window_bounds = array<i64: 1, 128>}, {transform_indices = @transform_12, window_bounds = array<i64: 8, 128>}]} {
    %c0 = arith.constant 0 : index
    %c0_0 = arith.constant 0 : index
    %0 = vector.load %arg1[%c0, %c0_0] : memref<8x256xbf16, #tpu.memory_space<vmem>>, vector<8x256xbf16>
    %c0_1 = arith.constant 0 : index
    %c0_2 = arith.constant 0 : index
    %1 = vector.load %arg3[%c0_1, %c0_2] : memref<256x512xbf16, #tpu.memory_space<vmem>>, vector<256x512xbf16>
    %cst = arith.constant dense<0.000000e+00> : vector<8x512xf32>
    %2 = tpu.matmul %0, %1, %cst {dimension_numbers = #tpu.dot_dimension_numbers<[1], [0], [0], [1], [0, 0, 1, 1], [], []>} : vector<8x256xbf16>, vector<256x512xbf16>, vector<8x512xf32> -> vector<8x512xf32>
    %3 = vector.extract_strided_slice %2 {offsets = [0, 0], sizes = [8, 128], strides = [1, 1]} : vector<8x512xf32> to vector<8x128xf32>
    %4 = vector.extract_strided_slice %2 {offsets = [0, 128], sizes = [8, 128], strides = [1, 1]} : vector<8x512xf32> to vector<8x128xf32>
    %5 = arith.maximumf %3, %4 : vector<8x128xf32>
    %6 = vector.extract_strided_slice %2 {offsets = [0, 256], sizes = [8, 128], strides = [1, 1]} : vector<8x512xf32> to vector<8x128xf32>
    %7 = vector.extract_strided_slice %2 {offsets = [0, 384], sizes = [8, 128], strides = [1, 1]} : vector<8x512xf32> to vector<8x128xf32>
    %8 = arith.maximumf %6, %7 : vector<8x128xf32>
    %9 = arith.maximumf %5, %8 : vector<8x128xf32>
    %c0_3 = arith.constant 0 : index
    %c0_4 = arith.constant 0 : index
    %10 = vector.load %arg4[%c0_3, %c0_4] : memref<1x128xf32, #tpu.memory_space<vmem>>, vector<1x128xf32>
    %11 = vector.broadcast %10 : vector<1x128xf32> to vector<8x128xf32>
    %12 = arith.addf %9, %11 : vector<8x128xf32>
    %cst_5 = arith.constant 0.000000e+00 : f32
    %13 = vector.broadcast %cst_5 : f32 to vector<8x128xf32>
    %14 = arith.maximumf %12, %13 : vector<8x128xf32>
    %15 = arith.truncf %14 : vector<8x128xf32> to vector<8x128xbf16>
    %c0_6 = arith.constant 0 : index
    %c0_7 = arith.constant 0 : index
    %16 = vector.load %arg5[%c0_6, %c0_7] : memref<128x256xbf16, #tpu.memory_space<vmem>>, vector<128x256xbf16>
    %cst_8 = arith.constant dense<0.000000e+00> : vector<8x256xf32>
    %17 = tpu.matmul %15, %16, %cst_8 {dimension_numbers = #tpu.dot_dimension_numbers<[1], [0], [0], [1], [0, 0, 1, 1], [], []>} : vector<8x128xbf16>, vector<128x256xbf16>, vector<8x256xf32> -> vector<8x256xf32>
    %c0_9 = arith.constant 0 : index
    %c0_10 = arith.constant 0 : index
    %18 = vector.load %arg6[%c0_9, %c0_10] : memref<1x256xf32, #tpu.memory_space<vmem>>, vector<1x256xf32>
    %19 = vector.broadcast %18 : vector<1x256xf32> to vector<8x256xf32>
    %20 = arith.addf %17, %19 : vector<8x256xf32>
    %cst_11 = arith.constant 0.000000e+00 : f32
    %21 = vector.broadcast %cst_11 : f32 to vector<8x256xf32>
    %22 = arith.maximumf %20, %21 : vector<8x256xf32>
    %23 = arith.truncf %22 : vector<8x256xf32> to vector<8x256xbf16>
    %c0_12 = arith.constant 0 : index
    %c0_13 = arith.constant 0 : index
    %24 = vector.load %arg7[%c0_12, %c0_13] : memref<256x256xbf16, #tpu.memory_space<vmem>>, vector<256x256xbf16>
    %cst_14 = arith.constant dense<0.000000e+00> : vector<8x256xf32>
    %25 = tpu.matmul %23, %24, %cst_14 {dimension_numbers = #tpu.dot_dimension_numbers<[1], [0], [0], [1], [0, 0, 1, 1], [], []>} : vector<8x256xbf16>, vector<256x256xbf16>, vector<8x256xf32> -> vector<8x256xf32>
    %c0_15 = arith.constant 0 : index
    %c0_16 = arith.constant 0 : index
    %26 = vector.load %arg2[%c0_15, %c0_16] : memref<8x8xbf16, #tpu.memory_space<vmem>>, vector<8x8xbf16>
    %c0_17 = arith.constant 0 : index
    %c0_18 = arith.constant 0 : index
    %27 = vector.load %arg8[%c0_17, %c0_18] : memref<8x256xbf16, #tpu.memory_space<vmem>>, vector<8x256xbf16>
    %cst_19 = arith.constant dense<0.000000e+00> : vector<8x256xf32>
    %28 = tpu.matmul %26, %27, %cst_19 {dimension_numbers = #tpu.dot_dimension_numbers<[1], [0], [0], [1], [0, 0, 1, 1], [], []>} : vector<8x8xbf16>, vector<8x256xbf16>, vector<8x256xf32> -> vector<8x256xf32>
    %29 = arith.addf %25, %28 : vector<8x256xf32>
    %cst_20 = arith.constant 0.000000e+00 : f32
    %30 = vector.broadcast %cst_20 : f32 to vector<8x256xf32>
    %31 = arith.maximumf %29, %30 : vector<8x256xf32>
    %32 = arith.truncf %31 : vector<8x256xf32> to vector<8x256xbf16>
    %c0_21 = arith.constant 0 : index
    %c0_22 = arith.constant 0 : index
    %33 = vector.load %arg9[%c0_21, %c0_22] : memref<256x128xbf16, #tpu.memory_space<vmem>>, vector<256x128xbf16>
    %cst_23 = arith.constant dense<0.000000e+00> : vector<8x128xf32>
    %34 = tpu.matmul %32, %33, %cst_23 {dimension_numbers = #tpu.dot_dimension_numbers<[1], [0], [0], [1], [0, 0, 1, 1], [], []>} : vector<8x256xbf16>, vector<256x128xbf16>, vector<8x128xf32> -> vector<8x128xf32>
    %c0_24 = arith.constant 0 : index
    %c0_25 = arith.constant 0 : index
    %35 = vector.load %arg10[%c0_24, %c0_25] : memref<1x128xf32, #tpu.memory_space<vmem>>, vector<1x128xf32>
    %36 = vector.broadcast %35 : vector<1x128xf32> to vector<8x128xf32>
    %37 = arith.addf %34, %36 : vector<8x128xf32>
    %cst_26 = arith.constant 0.000000e+00 : f32
    %38 = vector.broadcast %cst_26 : f32 to vector<8x128xf32>
    %39 = arith.maximumf %37, %38 : vector<8x128xf32>
    %40 = arith.truncf %39 : vector<8x128xf32> to vector<8x128xbf16>
    %c0_27 = arith.constant 0 : index
    %c0_28 = arith.constant 0 : index
    %41 = vector.load %arg11[%c0_27, %c0_28] : memref<128x128xbf16, #tpu.memory_space<vmem>>, vector<128x128xbf16>
    %cst_29 = arith.constant dense<0.000000e+00> : vector<8x128xf32>
    %42 = tpu.matmul %40, %41, %cst_29 {dimension_numbers = #tpu.dot_dimension_numbers<[1], [0], [0], [1], [0, 0, 1, 1], [], []>} : vector<8x128xbf16>, vector<128x128xbf16>, vector<8x128xf32> -> vector<8x128xf32>
    %c0_30 = arith.constant 0 : index
    %c0_31 = arith.constant 0 : index
    %43 = vector.load %arg12[%c0_30, %c0_31] : memref<1x128xf32, #tpu.memory_space<vmem>>, vector<1x128xf32>
    %44 = vector.broadcast %43 : vector<1x128xf32> to vector<8x128xf32>
    %45 = arith.addf %42, %44 : vector<8x128xf32>
    %c0_32 = arith.constant 0 : index
    %c0_33 = arith.constant 0 : index
    %46 = vector.load %arg13[%c0_32, %c0_33] : memref<8x128xf32, #tpu.memory_space<vmem>>, vector<8x128xf32>
    tpu.vector_store %arg13[%c0_32, %c0_33], %45 {strides = array<i32>} : memref<8x128xf32, #tpu.memory_space<vmem>>, vector<8x128xf32>,
    return
  }
  func.func @transform_0(%arg0: i32) -> (i32, i32) {
    %c0_i32 = arith.constant 0 : i32
    %c0_i32_0 = arith.constant 0 : i32
    return %arg0, %c0_i32 : i32, i32
  }
  func.func @transform_1(%arg0: i32) -> (i32, i32) {
    %c0_i32 = arith.constant 0 : i32
    %c0_i32_0 = arith.constant 0 : i32
    return %arg0, %c0_i32 : i32, i32
  }
  func.func @transform_2(%arg0: i32) -> (i32, i32) {
    %c0_i32 = arith.constant 0 : i32
    %c0_i32_0 = arith.constant 0 : i32
    %c0_i32_1 = arith.constant 0 : i32
    return %c0_i32, %c0_i32_0 : i32, i32
  }
  func.func @transform_3(%arg0: i32) -> (i32, i32) {
    %c0_i32 = arith.constant 0 : i32
    %c0_i32_0 = arith.constant 0 : i32
    %c0_i32_1 = arith.constant 0 : i32
    return %c0_i32, %c0_i32_0 : i32, i32
  }
  func.func @transform_4(%arg0: i32) -> (i32, i32) {
    %c0_i32 = arith.constant 0 : i32
    %c0_i32_0 = arith.constant 0 : i32
    %c0_i32_1 = arith.constant 0 : i32
    return %c0_i32, %c0_i32_0 : i32, i32
  }
  func.func @transform_5(%arg0: i32) -> (i32, i32) {
    %c0_i32 = arith.constant 0 : i32
    %c0_i32_0 = arith.constant 0 : i32
    %c0_i32_1 = arith.constant 0 : i32
    return %c0_i32, %c0_i32_0 : i32, i32
  }
  func.func @transform_6(%arg0: i32) -> (i32, i32) {
    %c0_i32 = arith.constant 0 : i32
    %c0_i32_0 = arith.constant 0 : i32
    %c0_i32_1 = arith.constant 0 : i32
    return %c0_i32, %c0_i32_0 : i32, i32
  }
  func.func @transform_7(%arg0: i32) -> (i32, i32) {
    %c0_i32 = arith.constant 0 : i32
    %c0_i32_0 = arith.constant 0 : i32
    %c0_i32_1 = arith.constant 0 : i32
    return %c0_i32, %c0_i32_0 : i32, i32
  }
  func.func @transform_8(%arg0: i32) -> (i32, i32) {
    %c0_i32 = arith.constant 0 : i32
    %c0_i32_0 = arith.constant 0 : i32
    %c0_i32_1 = arith.constant 0 : i32
    return %c0_i32, %c0_i32_0 : i32, i32
  }
  func.func @transform_9(%arg0: i32) -> (i32, i32) {
    %c0_i32 = arith.constant 0 : i32
    %c0_i32_0 = arith.constant 0 : i32
    %c0_i32_1 = arith.constant 0 : i32
    return %c0_i32, %c0_i32_0 : i32, i32
  }
  func.func @transform_10(%arg0: i32) -> (i32, i32) {
    %c0_i32 = arith.constant 0 : i32
    %c0_i32_0 = arith.constant 0 : i32
    %c0_i32_1 = arith.constant 0 : i32
    return %c0_i32, %c0_i32_0 : i32, i32
  }
  func.func @transform_11(%arg0: i32) -> (i32, i32) {
    %c0_i32 = arith.constant 0 : i32
    %c0_i32_0 = arith.constant 0 : i32
    %c0_i32_1 = arith.constant 0 : i32
    return %c0_i32, %c0_i32_0 : i32, i32
  }
  func.func @transform_12(%arg0: i32) -> (i32, i32) {
    %c0_i32 = arith.constant 0 : i32
    %c0_i32_0 = arith.constant 0 : i32
    return %arg0, %c0_i32 : i32, i32
  }
}

</mosaic_0001>

<llo_original>
// kernel: tpu_custom_call.1
$region0: #{tpu_custom_call.1}
  #allocation0 [shape = 'u32[]', space=smem, size = 0x4, offset = 0x4, fixed_abs, tag = 'smem constant byte address 0x4 - core index']
  #allocation1 [shape = 'u32[144,128]{1,0:T(1,128)}', space=vmem, size = 0x12000, scoped, tag = 'internal scratch']
  %s0 = inlined_call_operand.hbm [shape: bf16[16,256], index: 0, kind: input, shape index: {}]
  %s1 = inlined_call_operand.vmem [shape: bf16[16,8], index: 1, kind: input, shape index: {}]
  %s2 = inlined_call_operand.hbm [shape: bf16[256,512], index: 2, kind: input, shape index: {}]
  %s3 = inlined_call_operand.vmem [shape: f32[1,128], index: 3, kind: input, shape index: {}]
  %s4 = inlined_call_operand.hbm [shape: bf16[128,256], index: 4, kind: input, shape index: {}]
  %s5 = inlined_call_operand.vmem [shape: f32[1,256], index: 5, kind: input, shape index: {}]
  %s6 = inlined_call_operand.hbm [shape: bf16[256,256], index: 6, kind: input, shape index: {}]
  %s7 = inlined_call_operand.vmem [shape: bf16[8,256], index: 7, kind: input, shape index: {}]
  %s8 = inlined_call_operand.hbm [shape: bf16[256,128], index: 8, kind: input, shape index: {}]
  %s9 = inlined_call_operand.vmem [shape: f32[1,128], index: 9, kind: input, shape index: {}]
  %s10 = inlined_call_operand.hbm [shape: bf16[128,128], index: 10, kind: input, shape index: {}]
  %s11 = inlined_call_operand.vmem [shape: f32[1,128], index: 11, kind: input, shape index: {}]
  %s12 = inlined_call_operand.hbm [shape: f32[16,128], index: 12, kind: output, shape index: {}]
  %s13 = sld [smem:[#allocation0]]
  $region105: #{tpu_custom_call.1} parent=0
    _
  %s15 = ssub.s32 1, %s13
  %s16 = scalar_select 0, %s15, %s13
  $region1: #{tpu_custom_call.1} parent=0
    #allocation2 [shape = 'u8[8192]{0}', space=vmem, size = 0x2000, scoped, tag = 'input window, operand 0']
    #allocation3 [shape = 's32[2]{0}', space=sflag, size = 0x8, scoped, tag = 'scoped memory for tpu_custom_call.1']
    #allocation4 [shape = 's32[2]{0}', space=sflag, size = 0x8, scoped, tag = 'scoped memory for tpu_custom_call.1']
    #allocation5 [shape = 'u8[262144]{0}', space=vmem, size = 0x40000, scoped, tag = 'input window, operand 2, single buffered']
    #allocation6 [shape = 's32[1]{0}', space=sflag, size = 0x4, scoped, tag = 'scoped memory for tpu_custom_call.1']
    #allocation7 [shape = 'u8[65536]{0}', space=vmem, size = 0x10000, scoped, tag = 'input window, operand 4, single buffered']
    #allocation8 [shape = 'u8[131072]{0}', space=vmem, size = 0x20000, scoped, tag = 'input window, operand 6, single buffered']
    #allocation9 [shape = 's32[1]{0}', space=sflag, size = 0x4, scoped, tag = 'scoped memory for tpu_custom_call.1']
    #allocation10 [shape = 'u8[65536]{0}', space=vmem, size = 0x10000, scoped, tag = 'input window, operand 8, single buffered']
    #allocation11 [shape = 'u8[32768]{0}', space=vmem, size = 0x8000, scoped, tag = 'input window, operand 10, single buffered']
    #allocation12 [shape = 's32[1]{0}', space=sflag, size = 0x4, scoped, tag = 'scoped memory for tpu_custom_call.1']
    #allocation13 [shape = 'u8[8192]{0}', space=vmem, size = 0x2000, scoped, tag = 'output window, operand 0']
    %17 = vsyncpa [#allocation3], 0
    %s18 = scalar_lea.sflag [#allocation3], 1
    %19 = vsyncpa %s18, 0
    %20 = vsyncpa [#allocation6], 0
    %21 = vsyncpa [#allocation9], 0
    %22 = vsyncpa [#allocation12], 0
    %23 = vsyncpa [#allocation4], 0
    %s24 = scalar_lea.sflag [#allocation4], 1
    %25 = vsyncpa %s24, 0
    loop: start=0, step=1, limit=4
    $region2: #{tpu_custom_call.1} parent=1 // loop_pre_header
      _
    $region3: #{tpu_custom_call.1} parent=1 // loop_header
      %s27 = sphi 0, %s31
      %p28 = scmp.ge.s32.totalorder %s27, 4
      %s37 = sphi 0, %s39
      %s40 = sphi 0, %s37
      %s41 = sphi 0, %s40
      %s57 = sphi 0, %s41
      %s63 = sphi 0, %s65
      %s66 = sphi 0, %s63
      %s67 = sphi 0, %s66
      %s83 = sphi 0, %s67
      %s87 = sphi 0, %s87
      %s89 = sphi 0, %s87
      %s90 = sphi 0, %s89
      %s104 = sphi 0, %s90
      %s108 = sphi 0, %s108
      %s110 = sphi 0, %s108
      %s111 = sphi 0, %s110
      %s125 = sphi 0, %s111
      %s129 = sphi 0, %s129
      %s131 = sphi 0, %s129
      %s132 = sphi 0, %s131
      %s146 = sphi 0, %s132
      %s150 = sphi 0, %s150
      %s152 = sphi 0, %s150
      %s153 = sphi 0, %s152
      %s167 = sphi 0, %s153
      %s171 = sphi 0, %s171
      %s173 = sphi 0, %s171
      %s174 = sphi 0, %s173
      %s188 = sphi 0, %s174
      %s192 = sphi 0, %s192
      %s194 = sphi 0, %s192
      %s195 = sphi 0, %s194
      %s209 = sphi 0, %s195
      %s213 = sphi 0, %s213
      %s215 = sphi 0, %s213
      %s216 = sphi 0, %s215
      %s230 = sphi 0, %s216
      %s234 = sphi 0, %s234
      %s236 = sphi 0, %s234
      %s237 = sphi 0, %s236
      %s251 = sphi 0, %s237
      %s255 = sphi 0, %s255
      %s257 = sphi 0, %s255
      %s258 = sphi 0, %s257
      %s272 = sphi 0, %s258
      %s276 = sphi 0, %s276
      %s278 = sphi 0, %s276
      %s279 = sphi 0, %s278
      %s293 = sphi 0, %s279
      %s299 = sphi 0, %s301
      %s302 = sphi 0, %s299
      %s303 = sphi 0, %s302
      %s319 = sphi 0, %s303
    $region4: #{tpu_custom_call.1} parent=1 // loop_header_branch
      %30 = sbr.rel (%p28) target = $region8
    $region5: #{tpu_custom_call.1} parent=1 // loop_body
      %s32 = ssub.s32 %s27, 1
      %s33 = ssub.s32 %s27, 2
      %s34 = sadd.s32 %s27, 1
      %s35 = ssub.s32 %s27, %s34
      %p36 = scmp.eq.s32.totalorder %s35, 0
      %s38 = sadd.s32 %s37, 1
      %s39 = scalar_select %p36, %s37, %s38
      %p42 = pneg %p36
      %p43 = scmp.eq.s32.totalorder %s27, 1
      %p44 = por %p42, %p43
      %p45 = scmp.ne.s32.totalorder %s37, %s40
      %p46 = scmp.eq.s32.totalorder %s27, 0
      %p47 = por %p45, %p46
      %p48 = scmp.ne.s32.totalorder %s37, %s40
      %p49 = scmp.eq.s32.totalorder %s32, 1
      %p50 = por %p48, %p49
      %p51 = scmp.ne.s32.totalorder %s40, %s41
      %p52 = scmp.eq.s32.totalorder %s32, 0
      %p53 = por %p51, %p52
      %p54 = scmp.ne.s32.totalorder %s40, %s41
      %p55 = scmp.eq.s32.totalorder %s33, 1
      %p56 = por %p54, %p55
      %p58 = scmp.ne.s32.totalorder %s41, %s57
      %p59 = scmp.eq.s32.totalorder %s33, 0
      %p60 = por %p58, %p59
      %s61 = ssub.s32 %s27, %s34
      %p62 = scmp.eq.s32.totalorder %s61, 0
      %s64 = sadd.s32 %s63, 1
      %s65 = scalar_select %p62, %s63, %s64
      %p68 = pneg %p62
      %p69 = scmp.eq.s32.totalorder %s27, 1
      %p70 = por %p68, %p69
      %p71 = scmp.ne.s32.totalorder %s63, %s66
      %p72 = scmp.eq.s32.totalorder %s27, 0
      %p73 = por %p71, %p72
      %p74 = scmp.ne.s32.totalorder %s63, %s66
      %p75 = scmp.eq.s32.totalorder %s32, 1
      %p76 = por %p74, %p75
      %p77 = scmp.ne.s32.totalorder %s66, %s67
      %p78 = scmp.eq.s32.totalorder %s32, 0
      %p79 = por %p77, %p78
      %p80 = scmp.ne.s32.totalorder %s66, %s67
      %p81 = scmp.eq.s32.totalorder %s33, 1
      %p82 = por %p80, %p81
      %p84 = scmp.ne.s32.totalorder %s67, %s83
      %p85 = scmp.eq.s32.totalorder %s33, 0
      %p86 = por %p84, %p85
      %s88 = sadd.s32 %s87, 1
      %p91 = scmp.eq.s32.totalorder %s27, 1
      %p92 = scmp.ne.s32.totalorder %s87, %s89
      %p93 = scmp.eq.s32.totalorder %s27, 0
      %p94 = por %p92, %p93
      %p95 = scmp.ne.s32.totalorder %s87, %s89
      %p96 = scmp.eq.s32.totalorder %s32, 1
      %p97 = por %p95, %p96
      %p98 = scmp.ne.s32.totalorder %s89, %s90
      %p99 = scmp.eq.s32.totalorder %s32, 0
      %p100 = por %p98, %p99
      %p101 = scmp.ne.s32.totalorder %s89, %s90
      %p102 = scmp.eq.s32.totalorder %s33, 1
      %p103 = por %p101, %p102
      %p105 = scmp.ne.s32.totalorder %s90, %s104
      %p106 = scmp.eq.s32.totalorder %s33, 0
      %p107 = por %p105, %p106
      %s109 = sadd.s32 %s108, 1
      %p112 = scmp.eq.s32.totalorder %s27, 1
      %p113 = scmp.ne.s32.totalorder %s108, %s110
      %p114 = scmp.eq.s32.totalorder %s27, 0
      %p115 = por %p113, %p114
      %p116 = scmp.ne.s32.totalorder %s108, %s110
      %p117 = scmp.eq.s32.totalorder %s32, 1
      %p118 = por %p116, %p117
      %p119 = scmp.ne.s32.totalorder %s110, %s111
      %p120 = scmp.eq.s32.totalorder %s32, 0
      %p121 = por %p119, %p120
      %p122 = scmp.ne.s32.totalorder %s110, %s111
      %p123 = scmp.eq.s32.totalorder %s33, 1
      %p124 = por %p122, %p123
      %p126 = scmp.ne.s32.totalorder %s111, %s125
      %p127 = scmp.eq.s32.totalorder %s33, 0
      %p128 = por %p126, %p127
      %s130 = sadd.s32 %s129, 1
      %p133 = scmp.eq.s32.totalorder %s27, 1
      %p134 = scmp.ne.s32.totalorder %s129, %s131
      %p135 = scmp.eq.s32.totalorder %s27, 0
      %p136 = por %p134, %p135
      %p137 = scmp.ne.s32.totalorder %s129, %s131
      %p138 = scmp.eq.s32.totalorder %s32, 1
      %p139 = por %p137, %p138
      %p140 = scmp.ne.s32.totalorder %s131, %s132
      %p141 = scmp.eq.s32.totalorder %s32, 0
      %p142 = por %p140, %p141
      %p143 = scmp.ne.s32.totalorder %s131, %s132
      %p144 = scmp.eq.s32.totalorder %s33, 1
      %p145 = por %p143, %p144
      %p147 = scmp.ne.s32.totalorder %s132, %s146
      %p148 = scmp.eq.s32.totalorder %s33, 0
      %p149 = por %p147, %p148
      %s151 = sadd.s32 %s150, 1
      %p154 = scmp.eq.s32.totalorder %s27, 1
      %p155 = scmp.ne.s32.totalorder %s150, %s152
      %p156 = scmp.eq.s32.totalorder %s27, 0
      %p157 = por %p155, %p156
      %p158 = scmp.ne.s32.totalorder %s150, %s152
      %p159 = scmp.eq.s32.totalorder %s32, 1
      %p160 = por %p158, %p159
      %p161 = scmp.ne.s32.totalorder %s152, %s153
      %p162 = scmp.eq.s32.totalorder %s32, 0
      %p163 = por %p161, %p162
      %p164 = scmp.ne.s32.totalorder %s152, %s153
      %p165 = scmp.eq.s32.totalorder %s33, 1
      %p166 = por %p164, %p165
      %p168 = scmp.ne.s32.totalorder %s153, %s167
      %p169 = scmp.eq.s32.totalorder %s33, 0
      %p170 = por %p168, %p169
      %s172 = sadd.s32 %s171, 1
      %p175 = scmp.eq.s32.totalorder %s27, 1
      %p176 = scmp.ne.s32.totalorder %s171, %s173
      %p177 = scmp.eq.s32.totalorder %s27, 0
      %p178 = por %p176, %p177
      %p179 = scmp.ne.s32.totalorder %s171, %s173
      %p180 = scmp.eq.s32.totalorder %s32, 1
      %p181 = por %p179, %p180
      %p182 = scmp.ne.s32.totalorder %s173, %s174
      %p183 = scmp.eq.s32.totalorder %s32, 0
      %p184 = por %p182, %p183
      %p185 = scmp.ne.s32.totalorder %s173, %s174
      %p186 = scmp.eq.s32.totalorder %s33, 1
      %p187 = por %p185, %p186
      %p189 = scmp.ne.s32.totalorder %s174, %s188
      %p190 = scmp.eq.s32.totalorder %s33, 0
      %p191 = por %p189, %p190
      %s193 = sadd.s32 %s192, 1
      %p196 = scmp.eq.s32.totalorder %s27, 1
      %p197 = scmp.ne.s32.totalorder %s192, %s194
      %p198 = scmp.eq.s32.totalorder %s27, 0
      %p199 = por %p197, %p198
      %p200 = scmp.ne.s32.totalorder %s192, %s194
      %p201 = scmp.eq.s32.totalorder %s32, 1
      %p202 = por %p200, %p201
      %p203 = scmp.ne.s32.totalorder %s194, %s195
      %p204 = scmp.eq.s32.totalorder %s32, 0
      %p205 = por %p203, %p204
      %p206 = scmp.ne.s32.totalorder %s194, %s195
      %p207 = scmp.eq.s32.totalorder %s33, 1
      %p208 = por %p206, %p207
      %p210 = scmp.ne.s32.totalorder %s195, %s209
      %p211 = scmp.eq.s32.totalorder %s33, 0
      %p212 = por %p210, %p211
      %s214 = sadd.s32 %s213, 1
      %p217 = scmp.eq.s32.totalorder %s27, 1
      %p218 = scmp.ne.s32.totalorder %s213, %s215
      %p219 = scmp.eq.s32.totalorder %s27, 0
      %p220 = por %p218, %p219
      %p221 = scmp.ne.s32.totalorder %s213, %s215
      %p222 = scmp.eq.s32.totalorder %s32, 1
      %p223 = por %p221, %p222
      %p224 = scmp.ne.s32.totalorder %s215, %s216
      %p225 = scmp.eq.s32.totalorder %s32, 0
      %p226 = por %p224, %p225
      %p227 = scmp.ne.s32.totalorder %s215, %s216
      %p228 = scmp.eq.s32.totalorder %s33, 1
      %p229 = por %p227, %p228
      %p231 = scmp.ne.s32.totalorder %s216, %s230
      %p232 = scmp.eq.s32.totalorder %s33, 0
      %p233 = por %p231, %p232
      %s235 = sadd.s32 %s234, 1
      %p238 = scmp.eq.s32.totalorder %s27, 1
      %p239 = scmp.ne.s32.totalorder %s234, %s236
      %p240 = scmp.eq.s32.totalorder %s27, 0
      %p241 = por %p239, %p240
      %p242 = scmp.ne.s32.totalorder %s234, %s236
      %p243 = scmp.eq.s32.totalorder %s32, 1
      %p244 = por %p242, %p243
      %p245 = scmp.ne.s32.totalorder %s236, %s237
      %p246 = scmp.eq.s32.totalorder %s32, 0
      %p247 = por %p245, %p246
      %p248 = scmp.ne.s32.totalorder %s236, %s237
      %p249 = scmp.eq.s32.totalorder %s33, 1
      %p250 = por %p248, %p249
      %p252 = scmp.ne.s32.totalorder %s237, %s251
      %p253 = scmp.eq.s32.totalorder %s33, 0
      %p254 = por %p252, %p253
      %s256 = sadd.s32 %s255, 1
      %p259 = scmp.eq.s32.totalorder %s27, 1
      %p260 = scmp.ne.s32.totalorder %s255, %s257
      %p261 = scmp.eq.s32.totalorder %s27, 0
      %p262 = por %p260, %p261
      %p263 = scmp.ne.s32.totalorder %s255, %s257
      %p264 = scmp.eq.s32.totalorder %s32, 1
      %p265 = por %p263, %p264
      %p266 = scmp.ne.s32.totalorder %s257, %s258
      %p267 = scmp.eq.s32.totalorder %s32, 0
      %p268 = por %p266, %p267
      %p269 = scmp.ne.s32.totalorder %s257, %s258
      %p270 = scmp.eq.s32.totalorder %s33, 1
      %p271 = por %p269, %p270
      %p273 = scmp.ne.s32.totalorder %s258, %s272
      %p274 = scmp.eq.s32.totalorder %s33, 0
      %p275 = por %p273, %p274
      %s277 = sadd.s32 %s276, 1
      %p280 = scmp.eq.s32.totalorder %s27, 1
      %p281 = scmp.ne.s32.totalorder %s276, %s278
      %p282 = scmp.eq.s32.totalorder %s27, 0
      %p283 = por %p281, %p282
      %p284 = scmp.ne.s32.totalorder %s276, %s278
      %p285 = scmp.eq.s32.totalorder %s32, 1
      %p286 = por %p284, %p285
      %p287 = scmp.ne.s32.totalorder %s278, %s279
      %p288 = scmp.eq.s32.totalorder %s32, 0
      %p289 = por %p287, %p288
      %p290 = scmp.ne.s32.totalorder %s278, %s279
      %p291 = scmp.eq.s32.totalorder %s33, 1
      %p292 = por %p290, %p291
      %p294 = scmp.ne.s32.totalorder %s279, %s293
      %p295 = scmp.eq.s32.totalorder %s33, 0
      %p296 = por %p294, %p295
      %s297 = ssub.s32 %s27, %s34
      %p298 = scmp.eq.s32.totalorder %s297, 0
      %s300 = sadd.s32 %s299, 1
      %s301 = scalar_select %p298, %s299, %s300
      %p304 = pneg %p298
      %p305 = scmp.eq.s32.totalorder %s27, 1
      %p306 = por %p304, %p305
      %p307 = scmp.ne.s32.totalorder %s299, %s302
      %p308 = scmp.eq.s32.totalorder %s27, 0
      %p309 = por %p307, %p308
      %p310 = scmp.ne.s32.totalorder %s299, %s302
      %p311 = scmp.eq.s32.totalorder %s32, 1
      %p312 = por %p310, %p311
      %p313 = scmp.ne.s32.totalorder %s302, %s303
      %p314 = scmp.eq.s32.totalorder %s32, 0
      %p315 = por %p313, %p314
      %p316 = scmp.ne.s32.totalorder %s302, %s303
      %p317 = scmp.eq.s32.totalorder %s33, 1
      %p318 = por %p316, %p317
      %p320 = scmp.ne.s32.totalorder %s303, %s319
      %p321 = scmp.eq.s32.totalorder %s33, 0
      %p322 = por %p320, %p321
      %p323 = scmp.le.s32.totalorder 1, %s27
      %p324 = scmp.lt.s32.totalorder %s27, 3
      %p325 = pnand %p323, %p324
      %p326 = pneg %p325
      // Predicated region
      $region9: #{tpu_custom_call.1} parent=5 // pred_check
        _
      $region10: #{tpu_custom_call.1} parent=5 // pred_check_branch
        %328 = sbr.rel (%p325) target = $region12
      $region11: #{tpu_custom_call.1} parent=5 // pred_region
        %s329 = ssub.s32 %s27, 1
        // Predicated region
        $region13: #{tpu_custom_call.1} parent=11 // pred_check
          %p330 = pneg %p100
        $region14: #{tpu_custom_call.1} parent=11 // pred_check_branch
          %332 = sbr.rel (%p330) target = $region16
        $region15: #{tpu_custom_call.1} parent=11 // pred_region
          %s334 = ssub.s32 8192, 8192
          %335 = vsyncadd [#allocation6], %s334
          %s336 = sshll.u32 [#allocation5], 4
          %s337 = int_to_ptr.vmem [resolvable:$true] %s336
          %342 = dma.hbm_to_vmem [thread:$0]  %s2, 8192, %s337, [#allocation6], 256, 256, 16
        $region16: #{tpu_custom_call.1} parent=11 // pred_fallthru
          _
        // Predicated region
        $region17: #{tpu_custom_call.1} parent=11 // pred_check
          %p343 = pneg %p121
        $region18: #{tpu_custom_call.1} parent=11 // pred_check_branch
          %345 = sbr.rel (%p343) target = $region20
        $region19: #{tpu_custom_call.1} parent=11 // pred_region
          _
        $region20: #{tpu_custom_call.1} parent=11 // pred_fallthru
          _
        // Predicated region
        $region21: #{tpu_custom_call.1} parent=11 // pred_check
          %p346 = pneg %p142
        $region22: #{tpu_custom_call.1} parent=11 // pred_check_branch
          %348 = sbr.rel (%p346) target = $region24
        $region23: #{tpu_custom_call.1} parent=11 // pred_region
          %s350 = ssub.s32 2048, 2048
          %351 = vsyncadd [#allocation6], %s350
          %s352 = sshll.u32 [#allocation7], 4
          %s353 = int_to_ptr.vmem [resolvable:$true] %s352
          %358 = dma.hbm_to_vmem [thread:$0]  %s4, 2048, %s353, [#allocation6], 128, 128, 8
        $region24: #{tpu_custom_call.1} parent=11 // pred_fallthru
          _
        // Predicated region
        $region25: #{tpu_custom_call.1} parent=11 // pred_check
          %p359 = pneg %p163
        $region26: #{tpu_custom_call.1} parent=11 // pred_check_branch
          %361 = sbr.rel (%p359) target = $region28
        $region27: #{tpu_custom_call.1} parent=11 // pred_region
          _
        $region28: #{tpu_custom_call.1} parent=11 // pred_fallthru
          _
        // Predicated region
        $region29: #{tpu_custom_call.1} parent=11 // pred_check
          %p362 = pneg %p184
        $region30: #{tpu_custom_call.1} parent=11 // pred_check_branch
          %364 = sbr.rel (%p362) target = $region32
        $region31: #{tpu_custom_call.1} parent=11 // pred_region
          %s366 = ssub.s32 4096, 4096
          %367 = vsyncadd [#allocation9], %s366
          %s368 = sshll.u32 [#allocation8], 4
          %s369 = int_to_ptr.vmem [resolvable:$true] %s368
          %374 = dma.hbm_to_vmem [thread:$0]  %s6, 4096, %s369, [#allocation9], 128, 128, 8
        $region32: #{tpu_custom_call.1} parent=11 // pred_fallthru
          _
        // Predicated region
        $region33: #{tpu_custom_call.1} parent=11 // pred_check
          %p375 = pneg %p205
        $region34: #{tpu_custom_call.1} parent=11 // pred_check_branch
          %377 = sbr.rel (%p375) target = $region36
        $region35: #{tpu_custom_call.1} parent=11 // pred_region
          _
        $region36: #{tpu_custom_call.1} parent=11 // pred_fallthru
          _
        // Predicated region
        $region37: #{tpu_custom_call.1} parent=11 // pred_check
          %p378 = pneg %p226
        $region38: #{tpu_custom_call.1} parent=11 // pred_check_branch
          %380 = sbr.rel (%p378) target = $region40
        $region39: #{tpu_custom_call.1} parent=11 // pred_region
          %s382 = ssub.s32 2048, 2048
          %383 = vsyncadd [#allocation9], %s382
          %s384 = sshll.u32 [#allocation10], 4
          %s385 = int_to_ptr.vmem [resolvable:$true] %s384
          %390 = dma.hbm_to_vmem [thread:$0]  %s8, 2048, %s385, [#allocation9], 64, 64, 4
        $region40: #{tpu_custom_call.1} parent=11 // pred_fallthru
          _
        // Predicated region
        $region41: #{tpu_custom_call.1} parent=11 // pred_check
          %p391 = pneg %p247
        $region42: #{tpu_custom_call.1} parent=11 // pred_check_branch
          %393 = sbr.rel (%p391) target = $region44
        $region43: #{tpu_custom_call.1} parent=11 // pred_region
          _
        $region44: #{tpu_custom_call.1} parent=11 // pred_fallthru
          _
        // Predicated region
        $region45: #{tpu_custom_call.1} parent=11 // pred_check
          %p394 = pneg %p268
        $region46: #{tpu_custom_call.1} parent=11 // pred_check_branch
          %396 = sbr.rel (%p394) target = $region48
        $region47: #{tpu_custom_call.1} parent=11 // pred_region
          %s398 = ssub.s32 1024, 1024
          %399 = vsyncadd [#allocation12], %s398
          %s400 = sshll.u32 [#allocation11], 4
          %s401 = int_to_ptr.vmem [resolvable:$true] %s400
          %406 = dma.hbm_to_vmem [thread:$0]  %s10, 1024, %s401, [#allocation12], 64, 64, 4
        $region48: #{tpu_custom_call.1} parent=11 // pred_fallthru
          _
        // Predicated region
        $region49: #{tpu_custom_call.1} parent=11 // pred_check
          %p407 = pneg %p289
        $region50: #{tpu_custom_call.1} parent=11 // pred_check_branch
          %409 = sbr.rel (%p407) target = $region52
        $region51: #{tpu_custom_call.1} parent=11 // pred_region
          _
        $region52: #{tpu_custom_call.1} parent=11 // pred_fallthru
          _
      $region12: #{tpu_custom_call.1} parent=5 // pred_fallthru
        _
      %p410 = scmp.lt.s32.totalorder %s27, 2
      // Predicated region
      $region53: #{tpu_custom_call.1} parent=5 // pred_check
        %p411 = pneg %p410
      $region54: #{tpu_custom_call.1} parent=5 // pred_check_branch
        %413 = sbr.rel (%p411) target = $region56
      $region55: #{tpu_custom_call.1} parent=5 // pred_region
        // Predicated region
        $region57: #{tpu_custom_call.1} parent=55 // pred_check
          %p414 = pneg %p47
        $region58: #{tpu_custom_call.1} parent=55 // pred_check_branch
          %416 = sbr.rel (%p414) target = $region60
        $region59: #{tpu_custom_call.1} parent=55 // pred_region
          %s417 = sand.u32 %s37, 1
          %s418 = scalar_lea.sflag [#allocation3], %s417
          %s419 = sand.u32 %s37, 1
          %s420 = smul.addr %s419, 8
          %s421 = scalar_lea.vmem [#allocation2], %s420
          %s423 = ssub.s32 128, 128
          %424 = vsyncadd %s418, %s423
          %s425 = smul.addr %s27, 2
          %s426 = smul.addr %s425, 64
          %s427 = scalar_lea.hbm %s0, %s426
          %s429 = sshll.u32 %s421, 4
          %s430 = int_to_ptr.vmem [resolvable:$true] %s429
          %432 = dma.hbm_to_vmem [thread:$0]  %s427, 128, %s430, %s418
        $region60: #{tpu_custom_call.1} parent=55 // pred_fallthru
          _
        // Predicated region
        $region61: #{tpu_custom_call.1} parent=55 // pred_check
          %p433 = pneg %p73
        $region62: #{tpu_custom_call.1} parent=55 // pred_check_branch
          %435 = sbr.rel (%p433) target = $region64
        $region63: #{tpu_custom_call.1} parent=55 // pred_region
          %p436 = scmp.lt.s32.totalorder %s27, 1
          %s437 = scalar_select %p436, %s27, 1
          %s438 = smul.addr %s437, 4
          %s439 = scalar_lea.vmem %s1, %s438
        $region64: #{tpu_custom_call.1} parent=55 // pred_fallthru
          _
      $region56: #{tpu_custom_call.1} parent=5 // pred_fallthru
        _
      %p440 = scmp.le.s32.totalorder 1, %s27
      %p441 = scmp.lt.s32.totalorder %s27, 3
      %p442 = pnand %p440, %p441
      %p443 = pneg %p442
      // Predicated region
      $region65: #{tpu_custom_call.1} parent=5 // pred_check
        _
      $region66: #{tpu_custom_call.1} parent=5 // pred_check_branch
        %445 = sbr.rel (%p442) target = $region68
      $region67: #{tpu_custom_call.1} parent=5 // pred_region
        %s446 = ssub.s32 %s27, 1
        %s447 = sand.u32 %s40, 1
        %s448 = scalar_lea.sflag [#allocation3], %s447
        %s449 = sand.u32 %s40, 1
        %s450 = smul.addr %s449, 8
        %s451 = scalar_lea.vmem [#allocation2], %s450
        // Predicated region
        $region69: #{tpu_custom_call.1} parent=67 // pred_check
          %p452 = pneg %p53
        $region70: #{tpu_custom_call.1} parent=67 // pred_check_branch
          %454 = sbr.rel (%p452) target = $region72
        $region71: #{tpu_custom_call.1} parent=67 // pred_region
          %455 = dma.done %s448, 128
        $region72: #{tpu_custom_call.1} parent=67 // pred_fallthru
          _
        // Predicated region
        $region73: #{tpu_custom_call.1} parent=67 // pred_check
          %p456 = pneg %p100
        $region74: #{tpu_custom_call.1} parent=67 // pred_check_branch
          %458 = sbr.rel (%p456) target = $region76
        $region75: #{tpu_custom_call.1} parent=67 // pred_region
          %459 = dma.done [#allocation6], 8192
        $region76: #{tpu_custom_call.1} parent=67 // pred_fallthru
          _
        // Predicated region
        $region77: #{tpu_custom_call.1} parent=67 // pred_check
          %p460 = pneg %p142
        $region78: #{tpu_custom_call.1} parent=67 // pred_check_branch
          %462 = sbr.rel (%p460) target = $region80
        $region79: #{tpu_custom_call.1} parent=67 // pred_region
          %463 = dma.done [#allocation6], 2048
        $region80: #{tpu_custom_call.1} parent=67 // pred_fallthru
          _
        // Predicated region
        $region81: #{tpu_custom_call.1} parent=67 // pred_check
          %p464 = pneg %p184
        $region82: #{tpu_custom_call.1} parent=67 // pred_check_branch
          %466 = sbr.rel (%p464) target = $region84
        $region83: #{tpu_custom_call.1} parent=67 // pred_region
          %467 = dma.done [#allocation9], 4096
        $region84: #{tpu_custom_call.1} parent=67 // pred_fallthru
          _
        // Predicated region
        $region85: #{tpu_custom_call.1} parent=67 // pred_check
          %p468 = pneg %p226
        $region86: #{tpu_custom_call.1} parent=67 // pred_check_branch
          %470 = sbr.rel (%p468) target = $region88
        $region87: #{tpu_custom_call.1} parent=67 // pred_region
          %471 = dma.done [#allocation9], 2048
        $region88: #{tpu_custom_call.1} parent=67 // pred_fallthru
          _
        // Predicated region
        $region89: #{tpu_custom_call.1} parent=67 // pred_check
          %p472 = pneg %p268
        $region90: #{tpu_custom_call.1} parent=67 // pred_check_branch
          %474 = sbr.rel (%p472) target = $region92
        $region91: #{tpu_custom_call.1} parent=67 // pred_region
          %475 = dma.done [#allocation12], 1024
        $region92: #{tpu_custom_call.1} parent=67 // pred_fallthru
          _
        %s476 = sand.u32 %s40, 1
        %s477 = scalar_lea.sflag [#allocation3], %s476
        %s478 = sand.u32 %s40, 1
        %s479 = smul.addr %s478, 8
        %s480 = scalar_lea.vmem [#allocation2], %s479
        %p481 = pneg %p53
        %p482 = pneg %p50
        %p483 = scmp.lt.s32.totalorder %s32, 1
        %s484 = scalar_select %p483, %s32, 1
        %s485 = smul.addr %s484, 4
        %s486 = scalar_lea.vmem %s1, %s485
        %p487 = pneg %p79
        %p488 = pneg %p76
        %p489 = pneg %p100
        %p490 = pneg %p97
        %p491 = pneg %p121
        %p492 = pneg %p118
        %p493 = pneg %p142
        %p494 = pneg %p139
        %p495 = pneg %p163
        %p496 = pneg %p160
        %p497 = pneg %p184
        %p498 = pneg %p181
        %p499 = pneg %p205
        %p500 = pneg %p202
        %p501 = pneg %p226
        %p502 = pneg %p223
        %p503 = pneg %p247
        %p504 = pneg %p244
        %p505 = pneg %p268
        %p506 = pneg %p265
        %p507 = pneg %p289
        %p508 = pneg %p286
        %p509 = pneg %p315
        %p510 = pneg %p312
        %s511 = sand.u32 %s302, 1
        %s512 = scalar_lea.sflag [#allocation4], %s511
        %s513 = sand.u32 %s302, 1
        %s514 = smul.addr %s513, 8
        %s515 = scalar_lea.vmem [#allocation13], %s514
        %p516 = scmp.lt.s32.totalorder %s32, 1
        %s517 = scalar_select %p516, %s32, 1
        %s518 = smul.addr %s517, 4
        %s519 = scalar_lea.vmem %s1, %s518
        %v521 = vld [vmem:[%s451] sm:$0xff]
        %v522 = vld [vmem:[#allocation5] sm:$0xff]
        %v523 = vld [vmem:[#allocation5 + $0x8] sm:$0xff]
        %v524 = vld [vmem:[#allocation5 + $0x10] sm:$0xff]
        %v525 = vld [vmem:[#allocation5 + $0x18] sm:$0xff]
        %v526 = vld [vmem:[#allocation5 + $0x20] sm:$0xff]
        %v527 = vld [vmem:[#allocation5 + $0x28] sm:$0xff]
        %v528 = vld [vmem:[#allocation5 + $0x30] sm:$0xff]
        %v529 = vld [vmem:[#allocation5 + $0x38] sm:$0xff]
        %v530 = vld [vmem:[#allocation5 + $0x40] sm:$0xff]
        %v531 = vld [vmem:[#allocation5 + $0x48] sm:$0xff]
        %v532 = vld [vmem:[#allocation5 + $0x50] sm:$0xff]
        %v533 = vld [vmem:[#allocation5 + $0x58] sm:$0xff]
        %v534 = vld [vmem:[#allocation5 + $0x60] sm:$0xff]
        %v535 = vld [vmem:[#allocation5 + $0x68] sm:$0xff]
        %v536 = vld [vmem:[#allocation5 + $0x70] sm:$0xff]
        %v537 = vld [vmem:[#allocation5 + $0x78] sm:$0xff]
        %v538 = vld [vmem:[#allocation5 + $0x80] sm:$0xff]
        %v539 = vld [vmem:[#allocation5 + $0x88] sm:$0xff]
        %v540 = vld [vmem:[#allocation5 + $0x90] sm:$0xff]
        %v541 = vld [vmem:[#allocation5 + $0x98] sm:$0xff]
        %v542 = vld [vmem:[#allocation5 + $0xa0] sm:$0xff]
        %v543 = vld [vmem:[#allocation5 + $0xa8] sm:$0xff]
        %v544 = vld [vmem:[#allocation5 + $0xb0] sm:$0xff]
        %v545 = vld [vmem:[#allocation5 + $0xb8] sm:$0xff]
        %v546 = vld [vmem:[#allocation5 + $0xc0] sm:$0xff]
        %v547 = vld [vmem:[#allocation5 + $0xc8] sm:$0xff]
        %v548 = vld [vmem:[#allocation5 + $0xd0] sm:$0xff]
        %v549 = vld [vmem:[#allocation5 + $0xd8] sm:$0xff]
        %v550 = vld [vmem:[#allocation5 + $0xe0] sm:$0xff]
        %v551 = vld [vmem:[#allocation5 + $0xe8] sm:$0xff]
        %v552 = vld [vmem:[#allocation5 + $0xf0] sm:$0xff]
        %v553 = vld [vmem:[#allocation5 + $0xf8] sm:$0xff]
        %v554 = vld [vmem:[#allocation5 + $0x100] sm:$0xff]
        %v555 = vld [vmem:[#allocation5 + $0x108] sm:$0xff]
        %v556 = vld [vmem:[#allocation5 + $0x110] sm:$0xff]
        %v557 = vld [vmem:[#allocation5 + $0x118] sm:$0xff]
        %v558 = vld [vmem:[#allocation5 + $0x120] sm:$0xff]
        %v559 = vld [vmem:[#allocation5 + $0x128] sm:$0xff]
        %v560 = vld [vmem:[#allocation5 + $0x130] sm:$0xff]
        %v561 = vld [vmem:[#allocation5 + $0x138] sm:$0xff]
        %v562 = vld [vmem:[#allocation5 + $0x140] sm:$0xff]
        %v563 = vld [vmem:[#allocation5 + $0x148] sm:$0xff]
        %v564 = vld [vmem:[#allocation5 + $0x150] sm:$0xff]
        %v565 = vld [vmem:[#allocation5 + $0x158] sm:$0xff]
        %v566 = vld [vmem:[#allocation5 + $0x160] sm:$0xff]
        %v567 = vld [vmem:[#allocation5 + $0x168] sm:$0xff]
        %v568 = vld [vmem:[#allocation5 + $0x170] sm:$0xff]
        %v569 = vld [vmem:[#allocation5 + $0x178] sm:$0xff]
        %v570 = vld [vmem:[#allocation5 + $0x180] sm:$0xff]
        %v571 = vld [vmem:[#allocation5 + $0x188] sm:$0xff]
        %v572 = vld [vmem:[#allocation5 + $0x190] sm:$0xff]
        %v573 = vld [vmem:[#allocation5 + $0x198] sm:$0xff]
        %v574 = vld [vmem:[#allocation5 + $0x1a0] sm:$0xff]
        %v575 = vld [vmem:[#allocation5 + $0x1a8] sm:$0xff]
        %v576 = vld [vmem:[#allocation5 + $0x1b0] sm:$0xff]
        %v577 = vld [vmem:[#allocation5 + $0x1b8] sm:$0xff]
        %v578 = vld [vmem:[#allocation5 + $0x1c0] sm:$0xff]
        %v579 = vld [vmem:[#allocation5 + $0x1c8] sm:$0xff]
        %v580 = vld [vmem:[#allocation5 + $0x1d0] sm:$0xff]
        %v581 = vld [vmem:[#allocation5 + $0x1d8] sm:$0xff]
        %v582 = vld [vmem:[#allocation5 + $0x1e0] sm:$0xff]
        %v583 = vld [vmem:[#allocation5 + $0x1e8] sm:$0xff]
        %v584 = vld [vmem:[#allocation5 + $0x1f0] sm:$0xff]
        %v585 = vld [vmem:[#allocation5 + $0x1f8] sm:$0xff]
        %v587 = vunpack.c.l.b16 %v521
        %v588 = vunpack.c.h.b16 %v521
        %v589 = vpack.c.b16 %v587, %v587
        %v590 = vpack.c.b16 %v588, %v588
        %v657 = vunpack.c.l.b16 %v522
        %v658 = vunpack.c.h.b16 %v522
        %v659 = vunpack.c.l.b16 %v523
        %v660 = vunpack.c.h.b16 %v523
        %v661 = vunpack.c.l.b16 %v524
        %v662 = vunpack.c.h.b16 %v524
        %v663 = vunpack.c.l.b16 %v525
        %v664 = vunpack.c.h.b16 %v525
        %v665 = vunpack.c.l.b16 %v526
        %v666 = vunpack.c.h.b16 %v526
        %v667 = vunpack.c.l.b16 %v527
        %v668 = vunpack.c.h.b16 %v527
        %v669 = vunpack.c.l.b16 %v528
        %v670 = vunpack.c.h.b16 %v528
        %v671 = vunpack.c.l.b16 %v529
        %v672 = vunpack.c.h.b16 %v529
        %v673 = vunpack.c.l.b16 %v530
        %v674 = vunpack.c.h.b16 %v530
        %v675 = vunpack.c.l.b16 %v531
        %v676 = vunpack.c.h.b16 %v531
        %v677 = vunpack.c.l.b16 %v532
        %v678 = vunpack.c.h.b16 %v532
        %v679 = vunpack.c.l.b16 %v533
        %v680 = vunpack.c.h.b16 %v533
        %v681 = vunpack.c.l.b16 %v534
        %v682 = vunpack.c.h.b16 %v534
        %v683 = vunpack.c.l.b16 %v535
        %v684 = vunpack.c.h.b16 %v535
        %v685 = vunpack.c.l.b16 %v536
        %v686 = vunpack.c.h.b16 %v536
        %v687 = vunpack.c.l.b16 %v537
        %v688 = vunpack.c.h.b16 %v537
        %v689 = vunpack.c.l.b16 %v538
        %v690 = vunpack.c.h.b16 %v538
        %v691 = vunpack.c.l.b16 %v539
        %v692 = vunpack.c.h.b16 %v539
        %v693 = vunpack.c.l.b16 %v540
        %v694 = vunpack.c.h.b16 %v540
        %v695 = vunpack.c.l.b16 %v541
        %v696 = vunpack.c.h.b16 %v541
        %v697 = vunpack.c.l.b16 %v542
        %v698 = vunpack.c.h.b16 %v542
        %v699 = vunpack.c.l.b16 %v543
        %v700 = vunpack.c.h.b16 %v543
        %v701 = vunpack.c.l.b16 %v544
        %v702 = vunpack.c.h.b16 %v544
        %v703 = vunpack.c.l.b16 %v545
        %v704 = vunpack.c.h.b16 %v545
        %v705 = vunpack.c.l.b16 %v546
        %v706 = vunpack.c.h.b16 %v546
        %v707 = vunpack.c.l.b16 %v547
        %v708 = vunpack.c.h.b16 %v547
        %v709 = vunpack.c.l.b16 %v548
        %v710 = vunpack.c.h.b16 %v548
        %v711 = vunpack.c.l.b16 %v549
        %v712 = vunpack.c.h.b16 %v549
        %v713 = vunpack.c.l.b16 %v550
        %v714 = vunpack.c.h.b16 %v550
        %v715 = vunpack.c.l.b16 %v551
        %v716 = vunpack.c.h.b16 %v551
        %v717 = vunpack.c.l.b16 %v552
        %v718 = vunpack.c.h.b16 %v552
        %v719 = vunpack.c.l.b16 %v553
        %v720 = vunpack.c.h.b16 %v553
        %v721 = vunpack.c.l.b16 %v554
        %v722 = vunpack.c.h.b16 %v554
        %v723 = vunpack.c.l.b16 %v555
        %v724 = vunpack.c.h.b16 %v555
        %v725 = vunpack.c.l.b16 %v556
        %v726 = vunpack.c.h.b16 %v556
        %v727 = vunpack.c.l.b16 %v557
        %v728 = vunpack.c.h.b16 %v557
        %v729 = vunpack.c.l.b16 %v558
        %v730 = vunpack.c.h.b16 %v558
        %v731 = vunpack.c.l.b16 %v559
        %v732 = vunpack.c.h.b16 %v559
        %v733 = vunpack.c.l.b16 %v560
        %v734 = vunpack.c.h.b16 %v560
        %v735 = vunpack.c.l.b16 %v561
        %v736 = vunpack.c.h.b16 %v561
        %v737 = vunpack.c.l.b16 %v562
        %v738 = vunpack.c.h.b16 %v562
        %v739 = vunpack.c.l.b16 %v563
        %v740 = vunpack.c.h.b16 %v563
        %v741 = vunpack.c.l.b16 %v564
        %v742 = vunpack.c.h.b16 %v564
        %v743 = vunpack.c.l.b16 %v565
        %v744 = vunpack.c.h.b16 %v565
        %v745 = vunpack.c.l.b16 %v566
        %v746 = vunpack.c.h.b16 %v566
        %v747 = vunpack.c.l.b16 %v567
        %v748 = vunpack.c.h.b16 %v567
        %v749 = vunpack.c.l.b16 %v568
        %v750 = vunpack.c.h.b16 %v568
        %v751 = vunpack.c.l.b16 %v569
        %v752 = vunpack.c.h.b16 %v569
        %v753 = vunpack.c.l.b16 %v570
        %v754 = vunpack.c.h.b16 %v570
        %v755 = vunpack.c.l.b16 %v571
        %v756 = vunpack.c.h.b16 %v571
        %v757 = vunpack.c.l.b16 %v572
        %v758 = vunpack.c.h.b16 %v572
        %v759 = vunpack.c.l.b16 %v573
        %v760 = vunpack.c.h.b16 %v573
        %v761 = vunpack.c.l.b16 %v574
        %v762 = vunpack.c.h.b16 %v574
        %v763 = vunpack.c.l.b16 %v575
        %v764 = vunpack.c.h.b16 %v575
        %v765 = vunpack.c.l.b16 %v576
        %v766 = vunpack.c.h.b16 %v576
        %v767 = vunpack.c.l.b16 %v577
        %v768 = vunpack.c.h.b16 %v577
        %v769 = vunpack.c.l.b16 %v578
        %v770 = vunpack.c.h.b16 %v578
        %v771 = vunpack.c.l.b16 %v579
        %v772 = vunpack.c.h.b16 %v579
        %v773 = vunpack.c.l.b16 %v580
        %v774 = vunpack.c.h.b16 %v580
        %v775 = vunpack.c.l.b16 %v581
        %v776 = vunpack.c.h.b16 %v581
        %v777 = vunpack.c.l.b16 %v582
        %v778 = vunpack.c.h.b16 %v582
        %v779 = vunpack.c.l.b16 %v583
        %v780 = vunpack.c.h.b16 %v583
        %v781 = vunpack.c.l.b16 %v584
        %v782 = vunpack.c.h.b16 %v584
        %v783 = vunpack.c.l.b16 %v585
        %v784 = vunpack.c.h.b16 %v585
        %v785 = vpack.c.b16 %v661, %v657
        %v786 = vpack.c.b16 %v662, %v658
        %v787 = vpack.c.b16 %v663, %v659
        %v788 = vpack.c.b16 %v664, %v660
        %v789 = vpack.c.b16 %v669, %v665
        %v790 = vpack.c.b16 %v670, %v666
        %v791 = vpack.c.b16 %v671, %v667
        %v792 = vpack.c.b16 %v672, %v668
        %v793 = vpack.c.b16 %v677, %v673
        %v794 = vpack.c.b16 %v678, %v674
        %v795 = vpack.c.b16 %v679, %v675
        %v796 = vpack.c.b16 %v680, %v676
        %v797 = vpack.c.b16 %v685, %v681
        %v798 = vpack.c.b16 %v686, %v682
        %v799 = vpack.c.b16 %v687, %v683
        %v800 = vpack.c.b16 %v688, %v684
        %v801 = vpack.c.b16 %v693, %v689
        %v802 = vpack.c.b16 %v694, %v690
        %v803 = vpack.c.b16 %v695, %v691
        %v804 = vpack.c.b16 %v696, %v692
        %v805 = vpack.c.b16 %v701, %v697
        %v806 = vpack.c.b16 %v702, %v698
        %v807 = vpack.c.b16 %v703, %v699
        %v808 = vpack.c.b16 %v704, %v700
        %v809 = vpack.c.b16 %v709, %v705
        %v810 = vpack.c.b16 %v710, %v706
        %v811 = vpack.c.b16 %v711, %v707
        %v812 = vpack.c.b16 %v712, %v708
        %v813 = vpack.c.b16 %v717, %v713
        %v814 = vpack.c.b16 %v718, %v714
        %v815 = vpack.c.b16 %v719, %v715
        %v816 = vpack.c.b16 %v720, %v716
        %v817 = vpack.c.b16 %v725, %v721
        %v818 = vpack.c.b16 %v726, %v722
        %v819 = vpack.c.b16 %v727, %v723
        %v820 = vpack.c.b16 %v728, %v724
        %v821 = vpack.c.b16 %v733, %v729
        %v822 = vpack.c.b16 %v734, %v730
        %v823 = vpack.c.b16 %v735, %v731
        %v824 = vpack.c.b16 %v736, %v732
        %v825 = vpack.c.b16 %v741, %v737
        %v826 = vpack.c.b16 %v742, %v738
        %v827 = vpack.c.b16 %v743, %v739
        %v828 = vpack.c.b16 %v744, %v740
        %v829 = vpack.c.b16 %v749, %v745
        %v830 = vpack.c.b16 %v750, %v746
        %v831 = vpack.c.b16 %v751, %v747
        %v832 = vpack.c.b16 %v752, %v748
        %v833 = vpack.c.b16 %v757, %v753
        %v834 = vpack.c.b16 %v758, %v754
        %v835 = vpack.c.b16 %v759, %v755
        %v836 = vpack.c.b16 %v760, %v756
        %v837 = vpack.c.b16 %v765, %v761
        %v838 = vpack.c.b16 %v766, %v762
        %v839 = vpack.c.b16 %v767, %v763
        %v840 = vpack.c.b16 %v768, %v764
        %v841 = vpack.c.b16 %v773, %v769
        %v842 = vpack.c.b16 %v774, %v770
        %v843 = vpack.c.b16 %v775, %v771
        %v844 = vpack.c.b16 %v776, %v772
        %v845 = vpack.c.b16 %v781, %v777
        %v846 = vpack.c.b16 %v782, %v778
        %v847 = vpack.c.b16 %v783, %v779
        %v848 = vpack.c.b16 %v784, %v780
        %913 = vmatprep.subr.bf16.mxu0 %v786
        %914 = vmatpush1.bf16.msra.mxu0 %v785
        %915 = vmatprep.subr.bf16.mxu0 %v790
        %916 = vmatpush1.bf16.msra.mxu0 %v789
        %917 = vmatprep.subr.bf16.mxu0 %v794
        %918 = vmatpush1.bf16.msra.mxu0 %v793
        %919 = vmatprep.subr.bf16.mxu0 %v798
        %920 = vmatpush1.bf16.msra.mxu0 %v797
        %921 = vmatprep.subr.bf16.mxu0 %v802
        %922 = vmatpush1.bf16.msra.mxu0 %v801
        %923 = vmatprep.subr.bf16.mxu0 %v806
        %924 = vmatpush1.bf16.msra.mxu0 %v805
        %925 = vmatprep.subr.bf16.mxu0 %v810
        %926 = vmatpush1.bf16.msra.mxu0 %v809
        %927 = vmatprep.subr.bf16.mxu0 %v814
        %928 = vmatpush1.bf16.msra.mxu0 %v813
        %929 = vmatprep.subr.bf16.mxu0 %v818
        %930 = vmatpush1.bf16.msra.mxu0 %v817
        %931 = vmatprep.subr.bf16.mxu0 %v822
        %932 = vmatpush1.bf16.msra.mxu0 %v821
        %933 = vmatprep.subr.bf16.mxu0 %v826
        %934 = vmatpush1.bf16.msra.mxu0 %v825
        %935 = vmatprep.subr.bf16.mxu0 %v830
        %936 = vmatpush1.bf16.msra.mxu0 %v829
        %937 = vmatprep.subr.bf16.mxu0 %v834
        %938 = vmatpush1.bf16.msra.mxu0 %v833
        %939 = vmatprep.subr.bf16.mxu0 %v838
        %940 = vmatpush1.bf16.msra.mxu0 %v837
        %941 = vmatprep.subr.bf16.mxu0 %v842
        %942 = vmatpush1.bf16.msra.mxu0 %v841
        %943 = vmatprep.subr.bf16.mxu0 %v846
        %944 = vmatpush1.bf16.msra.mxu0 %v845
        %945 = vmatprep.mubr.bf16.mxu0 %v590
        %946 = vmatmul.mubr.bf16.gmra.mrb[0].mxu0 %v589
        %v947 = vpop.f32.mrb[0].mxu0
        %v948 = vadd.f32 0.0, %v947
        %v949 = vpop.f32.mrb[0].mxu0
        %v950 = vadd.f32 0.0, %v949
        %v951 = vpop.f32.mrb[0].mxu0
        %v952 = vpop.f32.mrb[0].mxu0
        %953 = vdwg.mxu0
        %954 = vmatprep.subr.bf16.mxu0 %v788
        %955 = vmatpush1.bf16.msra.mxu0 %v787
        %956 = vmatprep.subr.bf16.mxu0 %v792
        %957 = vmatpush1.bf16.msra.mxu0 %v791
        %958 = vmatprep.subr.bf16.mxu0 %v796
        %959 = vmatpush1.bf16.msra.mxu0 %v795
        %960 = vmatprep.subr.bf16.mxu0 %v800
        %961 = vmatpush1.bf16.msra.mxu0 %v799
        %962 = vmatprep.subr.bf16.mxu0 %v804
        %963 = vmatpush1.bf16.msra.mxu0 %v803
        %964 = vmatprep.subr.bf16.mxu0 %v808
        %965 = vmatpush1.bf16.msra.mxu0 %v807
        %966 = vmatprep.subr.bf16.mxu0 %v812
        %967 = vmatpush1.bf16.msra.mxu0 %v811
        %968 = vmatprep.subr.bf16.mxu0 %v816
        %969 = vmatpush1.bf16.msra.mxu0 %v815
        %970 = vmatprep.subr.bf16.mxu0 %v820
        %971 = vmatpush1.bf16.msra.mxu0 %v819
        %972 = vmatprep.subr.bf16.mxu0 %v824
        %973 = vmatpush1.bf16.msra.mxu0 %v823
        %974 = vmatprep.subr.bf16.mxu0 %v828
        %975 = vmatpush1.bf16.msra.mxu0 %v827
        %976 = vmatprep.subr.bf16.mxu0 %v832
        %977 = vmatpush1.bf16.msra.mxu0 %v831
        %978 = vmatprep.subr.bf16.mxu0 %v836
        %979 = vmatpush1.bf16.msra.mxu0 %v835
        %980 = vmatprep.subr.bf16.mxu0 %v840
        %981 = vmatpush1.bf16.msra.mxu0 %v839
        %982 = vmatprep.subr.bf16.mxu0 %v844
        %983 = vmatpush1.bf16.msra.mxu0 %v843
        %984 = vmatprep.subr.bf16.mxu0 %v848
        %985 = vmatpush1.bf16.msra.mxu0 %v847
        %986 = vmatprep.mubr.bf16.mxu0 %v590
        %987 = vmatmul.mubr.bf16.gmra.mrb[0].mxu0 %v589
        %v988 = vpop.f32.mrb[0].mxu0
        %v989 = vadd.f32 0.0, %v988
        %v990 = vpop.f32.mrb[0].mxu0
        %v991 = vadd.f32 0.0, %v990
        %v992 = vpop.f32.mrb[0].mxu0
        %v993 = vpop.f32.mrb[0].mxu0
        %994 = vdwg.mxu0
        %v995 = vmax.f32 %v948, %v950
        %v996 = vmax.f32 %v989, %v991
        %v997 = vmax.f32 %v995, %v996
        %v998 = vld [vmem:[%s3] sm:$0x1]
        %v1000 = vlaneseq
        %v1001 = vshrl.u32 %v1000, 7
        %v1002 = vsub.s32 0, %v1001
        %v1003 = vrot.slane %v998, %v1002
        %v1005 = vadd.f32 %v997, %v1003
        %v1006 = vmax.f32 %v1005, 0.0
        %v1007 = vpack.c.bf16 %v1006, %v1006
        %v1008 = vld [vmem:[#allocation7] sm:$0xff]
        %v1009 = vld [vmem:[#allocation7 + $0x8] sm:$0xff]
        %v1010 = vld [vmem:[#allocation7 + $0x10] sm:$0xff]
        %v1011 = vld [vmem:[#allocation7 + $0x18] sm:$0xff]
        %v1012 = vld [vmem:[#allocation7 + $0x20] sm:$0xff]
        %v1013 = vld [vmem:[#allocation7 + $0x28] sm:$0xff]
        %v1014 = vld [vmem:[#allocation7 + $0x30] sm:$0xff]
        %v1015 = vld [vmem:[#allocation7 + $0x38] sm:$0xff]
        %v1016 = vld [vmem:[#allocation7 + $0x40] sm:$0xff]
        %v1017 = vld [vmem:[#allocation7 + $0x48] sm:$0xff]
        %v1018 = vld [vmem:[#allocation7 + $0x50] sm:$0xff]
        %v1019 = vld [vmem:[#allocation7 + $0x58] sm:$0xff]
        %v1020 = vld [vmem:[#allocation7 + $0x60] sm:$0xff]
        %v1021 = vld [vmem:[#allocation7 + $0x68] sm:$0xff]
        %v1022 = vld [vmem:[#allocation7 + $0x70] sm:$0xff]
        %v1023 = vld [vmem:[#allocation7 + $0x78] sm:$0xff]
        %v1024 = vld [vmem:[%s5] sm:$0x3]
        %v1026 = vlaneseq
        %v1027 = vshrl.u32 %v1026, 7
        %v1028 = vsub.s32 0, %v1027
        %v1029 = vrot.slane %v1024, %v1028
        %v1030 = vlaneseq
        %v1031 = vshrl.u32 %v1030, 7
        %v1032 = vsub.s32 1, %v1031
        %v1033 = vrot.slane %v1024, %v1032
        %v1052 = vunpack.c.l.b16 %v1008
        %v1053 = vunpack.c.h.b16 %v1008
        %v1054 = vunpack.c.l.b16 %v1009
        %v1055 = vunpack.c.h.b16 %v1009
        %v1056 = vunpack.c.l.b16 %v1010
        %v1057 = vunpack.c.h.b16 %v1010
        %v1058 = vunpack.c.l.b16 %v1011
        %v1059 = vunpack.c.h.b16 %v1011
        %v1060 = vunpack.c.l.b16 %v1012
        %v1061 = vunpack.c.h.b16 %v1012
        %v1062 = vunpack.c.l.b16 %v1013
        %v1063 = vunpack.c.h.b16 %v1013
        %v1064 = vunpack.c.l.b16 %v1014
        %v1065 = vunpack.c.h.b16 %v1014
        %v1066 = vunpack.c.l.b16 %v1015
        %v1067 = vunpack.c.h.b16 %v1015
        %v1068 = vunpack.c.l.b16 %v1016
        %v1069 = vunpack.c.h.b16 %v1016
        %v1070 = vunpack.c.l.b16 %v1017
        %v1071 = vunpack.c.h.b16 %v1017
        %v1072 = vunpack.c.l.b16 %v1018
        %v1073 = vunpack.c.h.b16 %v1018
        %v1074 = vunpack.c.l.b16 %v1019
        %v1075 = vunpack.c.h.b16 %v1019
        %v1076 = vunpack.c.l.b16 %v1020
        %v1077 = vunpack.c.h.b16 %v1020
        %v1078 = vunpack.c.l.b16 %v1021
        %v1079 = vunpack.c.h.b16 %v1021
        %v1080 = vunpack.c.l.b16 %v1022
        %v1081 = vunpack.c.h.b16 %v1022
        %v1082 = vunpack.c.l.b16 %v1023
        %v1083 = vunpack.c.h.b16 %v1023
        %v1084 = vpack.c.b16 %v1054, %v1052
        %v1085 = vpack.c.b16 %v1055, %v1053
        %v1086 = vpack.c.b16 %v1058, %v1056
        %v1087 = vpack.c.b16 %v1059, %v1057
        %v1088 = vpack.c.b16 %v1062, %v1060
        %v1089 = vpack.c.b16 %v1063, %v1061
        %v1090 = vpack.c.b16 %v1066, %v1064
        %v1091 = vpack.c.b16 %v1067, %v1065
        %v1092 = vpack.c.b16 %v1070, %v1068
        %v1093 = vpack.c.b16 %v1071, %v1069
        %v1094 = vpack.c.b16 %v1074, %v1072
        %v1095 = vpack.c.b16 %v1075, %v1073
        %v1096 = vpack.c.b16 %v1078, %v1076
        %v1097 = vpack.c.b16 %v1079, %v1077
        %v1098 = vpack.c.b16 %v1082, %v1080
        %v1099 = vpack.c.b16 %v1083, %v1081
        %1116 = vmatprep.subr.bf16.mxu0 %v1085
        %1117 = vmatpush1.bf16.msra.mxu0 %v1084
        %1118 = vmatprep.subr.bf16.mxu0 %v1087
        %1119 = vmatpush1.bf16.msra.mxu0 %v1086
        %1120 = vmatprep.subr.bf16.mxu0 %v1089
        %1121 = vmatpush1.bf16.msra.mxu0 %v1088
        %1122 = vmatprep.subr.bf16.mxu0 %v1091
        %1123 = vmatpush1.bf16.msra.mxu0 %v1090
        %1124 = vmatprep.subr.bf16.mxu0 %v1093
        %1125 = vmatpush1.bf16.msra.mxu0 %v1092
        %1126 = vmatprep.subr.bf16.mxu0 %v1095
        %1127 = vmatpush1.bf16.msra.mxu0 %v1094
        %1128 = vmatprep.subr.bf16.mxu0 %v1097
        %1129 = vmatpush1.bf16.msra.mxu0 %v1096
        %1130 = vmatprep.subr.bf16.mxu0 %v1099
        %1131 = vmatpush1.bf16.msra.mxu0 %v1098
        %1132 = vmatprep.subr.bf16.mxu0 0
        %1133 = vmatpush1.bf16.msra.mxu0 0
        %1134 = vmatprep.subr.bf16.mxu0 0
        %1135 = vmatpush1.bf16.msra.mxu0 0
        %1136 = vmatprep.subr.bf16.mxu0 0
        %1137 = vmatpush1.bf16.msra.mxu0 0
        %1138 = vmatprep.subr.bf16.mxu0 0
        %1139 = vmatpush1.bf16.msra.mxu0 0
        %1140 = vmatprep.subr.bf16.mxu0 0
        %1141 = vmatpush1.bf16.msra.mxu0 0
        %1142 = vmatprep.subr.bf16.mxu0 0
        %1143 = vmatpush1.bf16.msra.mxu0 0
        %1144 = vmatprep.subr.bf16.mxu0 0
        %1145 = vmatpush1.bf16.msra.mxu0 0
        %1146 = vmatprep.subr.bf16.mxu0 0
        %1147 = vmatpush1.bf16.msra.mxu0 0
        %1148 = vmatprep.mubr.bf16.mxu0 0
        %1149 = vmatmul.mubr.bf16.gmra.mrb[0].mxu0 %v1007
        %v1150 = vpop.f32.mrb[0].mxu0
        %v1151 = vadd.f32 %v1029, %v1150
        %v1152 = vpop.f32.mrb[0].mxu0
        %v1153 = vadd.f32 %v1033, %v1152
        %v1154 = vpop.f32.mrb[0].mxu0
        %v1155 = vpop.f32.mrb[0].mxu0
        %1156 = vdwg.mxu0
        %v1157 = vmax.f32 %v1151, 0.0
        %v1158 = vmax.f32 %v1153, 0.0
        %v1159 = vpack.c.bf16 %v1157, %v1157
        %v1160 = vpack.c.bf16 %v1158, %v1158
        %v1161 = vld [vmem:[#allocation8] sm:$0xff]
        %v1162 = vld [vmem:[#allocation8 + $0x8] sm:$0xff]
        %v1163 = vld [vmem:[#allocation8 + $0x10] sm:$0xff]
        %v1164 = vld [vmem:[#allocation8 + $0x18] sm:$0xff]
        %v1165 = vld [vmem:[#allocation8 + $0x20] sm:$0xff]
        %v1166 = vld [vmem:[#allocation8 + $0x28] sm:$0xff]
        %v1167 = vld [vmem:[#allocation8 + $0x30] sm:$0xff]
        %v1168 = vld [vmem:[#allocation8 + $0x38] sm:$0xff]
        %v1169 = vld [vmem:[#allocation8 + $0x40] sm:$0xff]
        %v1170 = vld [vmem:[#allocation8 + $0x48] sm:$0xff]
        %v1171 = vld [vmem:[#allocation8 + $0x50] sm:$0xff]
        %v1172 = vld [vmem:[#allocation8 + $0x58] sm:$0xff]
        %v1173 = vld [vmem:[#allocation8 + $0x60] sm:$0xff]
        %v1174 = vld [vmem:[#allocation8 + $0x68] sm:$0xff]
        %v1175 = vld [vmem:[#allocation8 + $0x70] sm:$0xff]
        %v1176 = vld [vmem:[#allocation8 + $0x78] sm:$0xff]
        %v1177 = vld [vmem:[#allocation8 + $0x80] sm:$0xff]
        %v1178 = vld [vmem:[#allocation8 + $0x88] sm:$0xff]
        %v1179 = vld [vmem:[#allocation8 + $0x90] sm:$0xff]
        %v1180 = vld [vmem:[#allocation8 + $0x98] sm:$0xff]
        %v1181 = vld [vmem:[#allocation8 + $0xa0] sm:$0xff]
        %v1182 = vld [vmem:[#allocation8 + $0xa8] sm:$0xff]
        %v1183 = vld [vmem:[#allocation8 + $0xb0] sm:$0xff]
        %v1184 = vld [vmem:[#allocation8 + $0xb8] sm:$0xff]
        %v1185 = vld [vmem:[#allocation8 + $0xc0] sm:$0xff]
        %v1186 = vld [vmem:[#allocation8 + $0xc8] sm:$0xff]
        %v1187 = vld [vmem:[#allocation8 + $0xd0] sm:$0xff]
        %v1188 = vld [vmem:[#allocation8 + $0xd8] sm:$0xff]
        %v1189 = vld [vmem:[#allocation8 + $0xe0] sm:$0xff]
        %v1190 = vld [vmem:[#allocation8 + $0xe8] sm:$0xff]
        %v1191 = vld [vmem:[#allocation8 + $0xf0] sm:$0xff]
        %v1192 = vld [vmem:[#allocation8 + $0xf8] sm:$0xff]
        %v1193 = vld [vmem:[%s519] sm:$0xf]
        %v1194 = vld [vmem:[%s7] sm:$0xff]
        %v1196 = vunpack.c.l.b16 %v1194
        %v1197 = vunpack.c.h.b16 %v1194
        %v1198 = vpack.c.b16 %v1196, %v1196
        %v1199 = vpack.c.b16 %v1197, %v1197
        %vm1200 = vcmask 64512
        %v1202 = vsel %vm1200, %v1193, 0
        %vm1204 = vcmask 1043456
        %v1206 = vsel %vm1204, %v1198, 0
        %v1209 = vsel %vm1204, %v1199, 0
        %1211 = vmatprep.subr.bf16.mxu0 %v1209
        %1212 = vmatpush1.bf16.msra.mxu0 %v1206
        %1213 = vmatprep.subr.bf16.mxu0 0
        %1214 = vmatpush1.bf16.msra.mxu0 0
        %1215 = vmatprep.subr.bf16.mxu0 0
        %1216 = vmatpush1.bf16.msra.mxu0 0
        %1217 = vmatprep.subr.bf16.mxu0 0
        %1218 = vmatpush1.bf16.msra.mxu0 0
        %1219 = vmatprep.subr.bf16.mxu0 0
        %1220 = vmatpush1.bf16.msra.mxu0 0
        %1221 = vmatprep.subr.bf16.mxu0 0
        %1222 = vmatpush1.bf16.msra.mxu0 0
        %1223 = vmatprep.subr.bf16.mxu0 0
        %1224 = vmatpush1.bf16.msra.mxu0 0
        %1225 = vmatprep.subr.bf16.mxu0 0
        %1226 = vmatpush1.bf16.msra.mxu0 0
        %1227 = vmatprep.subr.bf16.mxu0 0
        %1228 = vmatpush1.bf16.msra.mxu0 0
        %1229 = vmatprep.subr.bf16.mxu0 0
        %1230 = vmatpush1.bf16.msra.mxu0 0
        %1231 = vmatprep.subr.bf16.mxu0 0
        %1232 = vmatpush1.bf16.msra.mxu0 0
        %1233 = vmatprep.subr.bf16.mxu0 0
        %1234 = vmatpush1.bf16.msra.mxu0 0
        %1235 = vmatprep.subr.bf16.mxu0 0
        %1236 = vmatpush1.bf16.msra.mxu0 0
        %1237 = vmatprep.subr.bf16.mxu0 0
        %1238 = vmatpush1.bf16.msra.mxu0 0
        %1239 = vmatprep.subr.bf16.mxu0 0
        %1240 = vmatpush1.bf16.msra.mxu0 0
        %1241 = vmatprep.subr.bf16.mxu0 0
        %1242 = vmatpush1.bf16.msra.mxu0 0
        %1243 = vmatprep.mubr.bf16.mxu0 0
        %1244 = vmatmul.mubr.bf16.gmra.mrb[0].mxu0 %v1202
        %v1245 = vpop.f32.mrb[0].mxu0
        %v1246 = vadd.f32 0.0, %v1245
        %v1247 = vpop.f32.mrb[0].mxu0
        %v1248 = vadd.f32 0.0, %v1247
        %v1249 = vpop.f32.mrb[0].mxu0
        %v1250 = vpop.f32.mrb[0].mxu0
        %1251 = vdwg.mxu0
        %v1284 = vunpack.c.l.b16 %v1161
        %v1285 = vunpack.c.h.b16 %v1161
        %v1286 = vunpack.c.l.b16 %v1162
        %v1287 = vunpack.c.h.b16 %v1162
        %v1288 = vunpack.c.l.b16 %v1163
        %v1289 = vunpack.c.h.b16 %v1163
        %v1290 = vunpack.c.l.b16 %v1164
        %v1291 = vunpack.c.h.b16 %v1164
        %v1292 = vunpack.c.l.b16 %v1165
        %v1293 = vunpack.c.h.b16 %v1165
        %v1294 = vunpack.c.l.b16 %v1166
        %v1295 = vunpack.c.h.b16 %v1166
        %v1296 = vunpack.c.l.b16 %v1167
        %v1297 = vunpack.c.h.b16 %v1167
        %v1298 = vunpack.c.l.b16 %v1168
        %v1299 = vunpack.c.h.b16 %v1168
        %v1300 = vunpack.c.l.b16 %v1169
        %v1301 = vunpack.c.h.b16 %v1169
        %v1302 = vunpack.c.l.b16 %v1170
        %v1303 = vunpack.c.h.b16 %v1170
        %v1304 = vunpack.c.l.b16 %v1171
        %v1305 = vunpack.c.h.b16 %v1171
        %v1306 = vunpack.c.l.b16 %v1172
        %v1307 = vunpack.c.h.b16 %v1172
        %v1308 = vunpack.c.l.b16 %v1173
        %v1309 = vunpack.c.h.b16 %v1173
        %v1310 = vunpack.c.l.b16 %v1174
        %v1311 = vunpack.c.h.b16 %v1174
        %v1312 = vunpack.c.l.b16 %v1175
        %v1313 = vunpack.c.h.b16 %v1175
        %v1314 = vunpack.c.l.b16 %v1176
        %v1315 = vunpack.c.h.b16 %v1176
        %v1316 = vunpack.c.l.b16 %v1177
        %v1317 = vunpack.c.h.b16 %v1177
        %v1318 = vunpack.c.l.b16 %v1178
        %v1319 = vunpack.c.h.b16 %v1178
        %v1320 = vunpack.c.l.b16 %v1179
        %v1321 = vunpack.c.h.b16 %v1179
        %v1322 = vunpack.c.l.b16 %v1180
        %v1323 = vunpack.c.h.b16 %v1180
        %v1324 = vunpack.c.l.b16 %v1181
        %v1325 = vunpack.c.h.b16 %v1181
        %v1326 = vunpack.c.l.b16 %v1182
        %v1327 = vunpack.c.h.b16 %v1182
        %v1328 = vunpack.c.l.b16 %v1183
        %v1329 = vunpack.c.h.b16 %v1183
        %v1330 = vunpack.c.l.b16 %v1184
        %v1331 = vunpack.c.h.b16 %v1184
        %v1332 = vunpack.c.l.b16 %v1185
        %v1333 = vunpack.c.h.b16 %v1185
        %v1334 = vunpack.c.l.b16 %v1186
        %v1335 = vunpack.c.h.b16 %v1186
        %v1336 = vunpack.c.l.b16 %v1187
        %v1337 = vunpack.c.h.b16 %v1187
        %v1338 = vunpack.c.l.b16 %v1188
        %v1339 = vunpack.c.h.b16 %v1188
        %v1340 = vunpack.c.l.b16 %v1189
        %v1341 = vunpack.c.h.b16 %v1189
        %v1342 = vunpack.c.l.b16 %v1190
        %v1343 = vunpack.c.h.b16 %v1190
        %v1344 = vunpack.c.l.b16 %v1191
        %v1345 = vunpack.c.h.b16 %v1191
        %v1346 = vunpack.c.l.b16 %v1192
        %v1347 = vunpack.c.h.b16 %v1192
        %v1348 = vpack.c.b16 %v1286, %v1284
        %v1349 = vpack.c.b16 %v1287, %v1285
        %v1350 = vpack.c.b16 %v1290, %v1288
        %v1351 = vpack.c.b16 %v1291, %v1289
        %v1352 = vpack.c.b16 %v1294, %v1292
        %v1353 = vpack.c.b16 %v1295, %v1293
        %v1354 = vpack.c.b16 %v1298, %v1296
        %v1355 = vpack.c.b16 %v1299, %v1297
        %v1356 = vpack.c.b16 %v1302, %v1300
        %v1357 = vpack.c.b16 %v1303, %v1301
        %v1358 = vpack.c.b16 %v1306, %v1304
        %v1359 = vpack.c.b16 %v1307, %v1305
        %v1360 = vpack.c.b16 %v1310, %v1308
        %v1361 = vpack.c.b16 %v1311, %v1309
        %v1362 = vpack.c.b16 %v1314, %v1312
        %v1363 = vpack.c.b16 %v1315, %v1313
        %v1364 = vpack.c.b16 %v1318, %v1316
        %v1365 = vpack.c.b16 %v1319, %v1317
        %v1366 = vpack.c.b16 %v1322, %v1320
        %v1367 = vpack.c.b16 %v1323, %v1321
        %v1368 = vpack.c.b16 %v1326, %v1324
        %v1369 = vpack.c.b16 %v1327, %v1325
        %v1370 = vpack.c.b16 %v1330, %v1328
        %v1371 = vpack.c.b16 %v1331, %v1329
        %v1372 = vpack.c.b16 %v1334, %v1332
        %v1373 = vpack.c.b16 %v1335, %v1333
        %v1374 = vpack.c.b16 %v1338, %v1336
        %v1375 = vpack.c.b16 %v1339, %v1337
        %v1376 = vpack.c.b16 %v1342, %v1340
        %v1377 = vpack.c.b16 %v1343, %v1341
        %v1378 = vpack.c.b16 %v1346, %v1344
        %v1379 = vpack.c.b16 %v1347, %v1345
        %1412 = vmatprep.subr.bf16.mxu0 %v1349
        %1413 = vmatpush1.bf16.msra.mxu0 %v1348
        %1414 = vmatprep.subr.bf16.mxu0 %v1351
        %1415 = vmatpush1.bf16.msra.mxu0 %v1350
        %1416 = vmatprep.subr.bf16.mxu0 %v1353
        %1417 = vmatpush1.bf16.msra.mxu0 %v1352
        %1418 = vmatprep.subr.bf16.mxu0 %v1355
        %1419 = vmatpush1.bf16.msra.mxu0 %v1354
        %1420 = vmatprep.subr.bf16.mxu0 %v1357
        %1421 = vmatpush1.bf16.msra.mxu0 %v1356
        %1422 = vmatprep.subr.bf16.mxu0 %v1359
        %1423 = vmatpush1.bf16.msra.mxu0 %v1358
        %1424 = vmatprep.subr.bf16.mxu0 %v1361
        %1425 = vmatpush1.bf16.msra.mxu0 %v1360
        %1426 = vmatprep.subr.bf16.mxu0 %v1363
        %1427 = vmatpush1.bf16.msra.mxu0 %v1362
        %1428 = vmatprep.subr.bf16.mxu0 %v1365
        %1429 = vmatpush1.bf16.msra.mxu0 %v1364
        %1430 = vmatprep.subr.bf16.mxu0 %v1367
        %1431 = vmatpush1.bf16.msra.mxu0 %v1366
        %1432 = vmatprep.subr.bf16.mxu0 %v1369
        %1433 = vmatpush1.bf16.msra.mxu0 %v1368
        %1434 = vmatprep.subr.bf16.mxu0 %v1371
        %1435 = vmatpush1.bf16.msra.mxu0 %v1370
        %1436 = vmatprep.subr.bf16.mxu0 %v1373
        %1437 = vmatpush1.bf16.msra.mxu0 %v1372
        %1438 = vmatprep.subr.bf16.mxu0 %v1375
        %1439 = vmatpush1.bf16.msra.mxu0 %v1374
        %1440 = vmatprep.subr.bf16.mxu0 %v1377
        %1441 = vmatpush1.bf16.msra.mxu0 %v1376
        %1442 = vmatprep.subr.bf16.mxu0 %v1379
        %1443 = vmatpush1.bf16.msra.mxu0 %v1378
        %1444 = vmatprep.mubr.bf16.mxu0 %v1160
        %1445 = vmatmul.mubr.bf16.gmra.mrb[0].mxu0 %v1159
        %v1446 = vpop.f32.mrb[0].mxu0
        %v1447 = vadd.f32 %v1246, %v1446
        %v1448 = vpop.f32.mrb[0].mxu0
        %v1449 = vadd.f32 %v1248, %v1448
        %v1450 = vpop.f32.mrb[0].mxu0
        %v1451 = vpop.f32.mrb[0].mxu0
        %1452 = vdwg.mxu0
        %v1453 = vmax.f32 %v1447, 0.0
        %v1454 = vmax.f32 %v1449, 0.0
        %v1455 = vpack.c.bf16 %v1453, %v1453
        %v1456 = vpack.c.bf16 %v1454, %v1454
        %v1457 = vld [vmem:[#allocation10] sm:$0xf]
        %v1458 = vld [vmem:[#allocation10 + $0x4] sm:$0xf]
        %v1459 = vld [vmem:[#allocation10 + $0x8] sm:$0xf]
        %v1460 = vld [vmem:[#allocation10 + $0xc] sm:$0xf]
        %v1461 = vld [vmem:[#allocation10 + $0x10] sm:$0xf]
        %v1462 = vld [vmem:[#allocation10 + $0x14] sm:$0xf]
        %v1463 = vld [vmem:[#allocation10 + $0x18] sm:$0xf]
        %v1464 = vld [vmem:[#allocation10 + $0x1c] sm:$0xf]
        %v1465 = vld [vmem:[#allocation10 + $0x20] sm:$0xf]
        %v1466 = vld [vmem:[#allocation10 + $0x24] sm:$0xf]
        %v1467 = vld [vmem:[#allocation10 + $0x28] sm:$0xf]
        %v1468 = vld [vmem:[#allocation10 + $0x2c] sm:$0xf]
        %v1469 = vld [vmem:[#allocation10 + $0x30] sm:$0xf]
        %v1470 = vld [vmem:[#allocation10 + $0x34] sm:$0xf]
        %v1471 = vld [vmem:[#allocation10 + $0x38] sm:$0xf]
        %v1472 = vld [vmem:[#allocation10 + $0x3c] sm:$0xf]
        %v1473 = vld [vmem:[#allocation10 + $0x40] sm:$0xf]
        %v1474 = vld [vmem:[#allocation10 + $0x44] sm:$0xf]
        %v1475 = vld [vmem:[#allocation10 + $0x48] sm:$0xf]
        %v1476 = vld [vmem:[#allocation10 + $0x4c] sm:$0xf]
        %v1477 = vld [vmem:[#allocation10 + $0x50] sm:$0xf]
        %v1478 = vld [vmem:[#allocation10 + $0x54] sm:$0xf]
        %v1479 = vld [vmem:[#allocation10 + $0x58] sm:$0xf]
        %v1480 = vld [vmem:[#allocation10 + $0x5c] sm:$0xf]
        %v1481 = vld [vmem:[#allocation10 + $0x60] sm:$0xf]
        %v1482 = vld [vmem:[#allocation10 + $0x64] sm:$0xf]
        %v1483 = vld [vmem:[#allocation10 + $0x68] sm:$0xf]
        %v1484 = vld [vmem:[#allocation10 + $0x6c] sm:$0xf]
        %v1485 = vld [vmem:[#allocation10 + $0x70] sm:$0xf]
        %v1486 = vld [vmem:[#allocation10 + $0x74] sm:$0xf]
        %v1487 = vld [vmem:[#allocation10 + $0x78] sm:$0xf]
        %v1488 = vld [vmem:[#allocation10 + $0x7c] sm:$0xf]
        %v1489 = vld [vmem:[%s9] sm:$0x1]
        %v1491 = vlaneseq
        %v1492 = vshrl.u32 %v1491, 7
        %v1493 = vsub.s32 0, %v1492
        %v1494 = vrot.slane %v1489, %v1493
        %v1528 = vunpack.c.l.b16 %v1457
        %v1529 = vunpack.c.l.b16 %v1458
        %v1530 = vunpack.c.l.b16 %v1459
        %v1531 = vunpack.c.l.b16 %v1460
        %v1532 = vunpack.c.l.b16 %v1461
        %v1533 = vunpack.c.l.b16 %v1462
        %v1534 = vunpack.c.l.b16 %v1463
        %v1535 = vunpack.c.l.b16 %v1464
        %v1536 = vunpack.c.l.b16 %v1465
        %v1537 = vunpack.c.l.b16 %v1466
        %v1538 = vunpack.c.l.b16 %v1467
        %v1539 = vunpack.c.l.b16 %v1468
        %v1540 = vunpack.c.l.b16 %v1469
        %v1541 = vunpack.c.l.b16 %v1470
        %v1542 = vunpack.c.l.b16 %v1471
        %v1543 = vunpack.c.l.b16 %v1472
        %v1544 = vunpack.c.l.b16 %v1473
        %v1545 = vunpack.c.l.b16 %v1474
        %v1546 = vunpack.c.l.b16 %v1475
        %v1547 = vunpack.c.l.b16 %v1476
        %v1548 = vunpack.c.l.b16 %v1477
        %v1549 = vunpack.c.l.b16 %v1478
        %v1550 = vunpack.c.l.b16 %v1479
        %v1551 = vunpack.c.l.b16 %v1480
        %v1552 = vunpack.c.l.b16 %v1481
        %v1553 = vunpack.c.l.b16 %v1482
        %v1554 = vunpack.c.l.b16 %v1483
        %v1555 = vunpack.c.l.b16 %v1484
        %v1556 = vunpack.c.l.b16 %v1485
        %v1557 = vunpack.c.l.b16 %v1486
        %v1558 = vunpack.c.l.b16 %v1487
        %v1559 = vunpack.c.l.b16 %v1488
        %v1560 = vpack.c.b16 %v1529, %v1528
        %v1561 = vpack.c.b16 %v1531, %v1530
        %v1562 = vpack.c.b16 %v1533, %v1532
        %v1563 = vpack.c.b16 %v1535, %v1534
        %v1564 = vpack.c.b16 %v1537, %v1536
        %v1565 = vpack.c.b16 %v1539, %v1538
        %v1566 = vpack.c.b16 %v1541, %v1540
        %v1567 = vpack.c.b16 %v1543, %v1542
        %v1568 = vpack.c.b16 %v1545, %v1544
        %v1569 = vpack.c.b16 %v1547, %v1546
        %v1570 = vpack.c.b16 %v1549, %v1548
        %v1571 = vpack.c.b16 %v1551, %v1550
        %v1572 = vpack.c.b16 %v1553, %v1552
        %v1573 = vpack.c.b16 %v1555, %v1554
        %v1574 = vpack.c.b16 %v1557, %v1556
        %v1575 = vpack.c.b16 %v1559, %v1558
        %1592 = vmatprep.subr.bf16.mxu0 0
        %1593 = vmatpush1.bf16.msra.mxu0 %v1560
        %1594 = vmatprep.subr.bf16.mxu0 0
        %1595 = vmatpush1.bf16.msra.mxu0 %v1561
        %1596 = vmatprep.subr.bf16.mxu0 0
        %1597 = vmatpush1.bf16.msra.mxu0 %v1562
        %1598 = vmatprep.subr.bf16.mxu0 0
        %1599 = vmatpush1.bf16.msra.mxu0 %v1563
        %1600 = vmatprep.subr.bf16.mxu0 0
        %1601 = vmatpush1.bf16.msra.mxu0 %v1564
        %1602 = vmatprep.subr.bf16.mxu0 0
        %1603 = vmatpush1.bf16.msra.mxu0 %v1565
        %1604 = vmatprep.subr.bf16.mxu0 0
        %1605 = vmatpush1.bf16.msra.mxu0 %v1566
        %1606 = vmatprep.subr.bf16.mxu0 0
        %1607 = vmatpush1.bf16.msra.mxu0 %v1567
        %1608 = vmatprep.subr.bf16.mxu0 0
        %1609 = vmatpush1.bf16.msra.mxu0 %v1568
        %1610 = vmatprep.subr.bf16.mxu0 0
        %1611 = vmatpush1.bf16.msra.mxu0 %v1569
        %1612 = vmatprep.subr.bf16.mxu0 0
        %1613 = vmatpush1.bf16.msra.mxu0 %v1570
        %1614 = vmatprep.subr.bf16.mxu0 0
        %1615 = vmatpush1.bf16.msra.mxu0 %v1571
        %1616 = vmatprep.subr.bf16.mxu0 0
        %1617 = vmatpush1.bf16.msra.mxu0 %v1572
        %1618 = vmatprep.subr.bf16.mxu0 0
        %1619 = vmatpush1.bf16.msra.mxu0 %v1573
        %1620 = vmatprep.subr.bf16.mxu0 0
        %1621 = vmatpush1.bf16.msra.mxu0 %v1574
        %1622 = vmatprep.subr.bf16.mxu0 0
        %1623 = vmatpush1.bf16.msra.mxu0 %v1575
        %1624 = vmatprep.mubr.bf16.mxu0 %v1456
        %1625 = vmatmul.mubr.bf16.gmra.mrb[0].mxu0 %v1455
        %v1626 = vpop.f32.mrb[0].mxu0
        %v1627 = vadd.f32 %v1494, %v1626
        %v1628 = vpop.f32.mrb[0].mxu0
        %v1629 = vpop.f32.mrb[0].mxu0
        %v1630 = vpop.f32.mrb[0].mxu0
        %1631 = vdwg.mxu0
        %v1632 = vmax.f32 %v1627, 0.0
        %v1633 = vpack.c.bf16 %v1632, %v1632
        %v1634 = vld [vmem:[#allocation11] sm:$0xf]
        %v1635 = vld [vmem:[#allocation11 + $0x4] sm:$0xf]
        %v1636 = vld [vmem:[#allocation11 + $0x8] sm:$0xf]
        %v1637 = vld [vmem:[#allocation11 + $0xc] sm:$0xf]
        %v1638 = vld [vmem:[#allocation11 + $0x10] sm:$0xf]
        %v1639 = vld [vmem:[#allocation11 + $0x14] sm:$0xf]
        %v1640 = vld [vmem:[#allocation11 + $0x18] sm:$0xf]
        %v1641 = vld [vmem:[#allocation11 + $0x1c] sm:$0xf]
        %v1642 = vld [vmem:[#allocation11 + $0x20] sm:$0xf]
        %v1643 = vld [vmem:[#allocation11 + $0x24] sm:$0xf]
        %v1644 = vld [vmem:[#allocation11 + $0x28] sm:$0xf]
        %v1645 = vld [vmem:[#allocation11 + $0x2c] sm:$0xf]
        %v1646 = vld [vmem:[#allocation11 + $0x30] sm:$0xf]
        %v1647 = vld [vmem:[#allocation11 + $0x34] sm:$0xf]
        %v1648 = vld [vmem:[#allocation11 + $0x38] sm:$0xf]
        %v1649 = vld [vmem:[#allocation11 + $0x3c] sm:$0xf]
        %v1650 = vld [vmem:[%s11] sm:$0x1]
        %v1652 = vlaneseq
        %v1653 = vshrl.u32 %v1652, 7
        %v1654 = vsub.s32 0, %v1653
        %v1655 = vrot.slane %v1650, %v1654
        %v1673 = vunpack.c.l.b16 %v1634
        %v1674 = vunpack.c.l.b16 %v1635
        %v1675 = vunpack.c.l.b16 %v1636
        %v1676 = vunpack.c.l.b16 %v1637
        %v1677 = vunpack.c.l.b16 %v1638
        %v1678 = vunpack.c.l.b16 %v1639
        %v1679 = vunpack.c.l.b16 %v1640
        %v1680 = vunpack.c.l.b16 %v1641
        %v1681 = vunpack.c.l.b16 %v1642
        %v1682 = vunpack.c.l.b16 %v1643
        %v1683 = vunpack.c.l.b16 %v1644
        %v1684 = vunpack.c.l.b16 %v1645
        %v1685 = vunpack.c.l.b16 %v1646
        %v1686 = vunpack.c.l.b16 %v1647
        %v1687 = vunpack.c.l.b16 %v1648
        %v1688 = vunpack.c.l.b16 %v1649
        %v1689 = vpack.c.b16 %v1674, %v1673
        %v1690 = vpack.c.b16 %v1676, %v1675
        %v1691 = vpack.c.b16 %v1678, %v1677
        %v1692 = vpack.c.b16 %v1680, %v1679
        %v1693 = vpack.c.b16 %v1682, %v1681
        %v1694 = vpack.c.b16 %v1684, %v1683
        %v1695 = vpack.c.b16 %v1686, %v1685
        %v1696 = vpack.c.b16 %v1688, %v1687
        %1705 = vmatprep.subr.bf16.mxu0 0
        %1706 = vmatpush1.bf16.msra.mxu0 %v1689
        %1707 = vmatprep.subr.bf16.mxu0 0
        %1708 = vmatpush1.bf16.msra.mxu0 %v1690
        %1709 = vmatprep.subr.bf16.mxu0 0
        %1710 = vmatpush1.bf16.msra.mxu0 %v1691
        %1711 = vmatprep.subr.bf16.mxu0 0
        %1712 = vmatpush1.bf16.msra.mxu0 %v1692
        %1713 = vmatprep.subr.bf16.mxu0 0
        %1714 = vmatpush1.bf16.msra.mxu0 %v1693
        %1715 = vmatprep.subr.bf16.mxu0 0
        %1716 = vmatpush1.bf16.msra.mxu0 %v1694
        %1717 = vmatprep.subr.bf16.mxu0 0
        %1718 = vmatpush1.bf16.msra.mxu0 %v1695
        %1719 = vmatprep.subr.bf16.mxu0 0
        %1720 = vmatpush1.bf16.msra.mxu0 %v1696
        %1721 = vmatprep.subr.bf16.mxu0 0
        %1722 = vmatpush1.bf16.msra.mxu0 0
        %1723 = vmatprep.subr.bf16.mxu0 0
        %1724 = vmatpush1.bf16.msra.mxu0 0
        %1725 = vmatprep.subr.bf16.mxu0 0
        %1726 = vmatpush1.bf16.msra.mxu0 0
        %1727 = vmatprep.subr.bf16.mxu0 0
        %1728 = vmatpush1.bf16.msra.mxu0 0
        %1729 = vmatprep.subr.bf16.mxu0 0
        %1730 = vmatpush1.bf16.msra.mxu0 0
        %1731 = vmatprep.subr.bf16.mxu0 0
        %1732 = vmatpush1.bf16.msra.mxu0 0
        %1733 = vmatprep.subr.bf16.mxu0 0
        %1734 = vmatpush1.bf16.msra.mxu0 0
        %1735 = vmatprep.subr.bf16.mxu0 0
        %1736 = vmatpush1.bf16.msra.mxu0 0
        %1737 = vmatprep.mubr.bf16.mxu0 0
        %1738 = vmatmul.mubr.bf16.gmra.mrb[0].mxu0 %v1633
        %v1739 = vpop.f32.mrb[0].mxu0
        %v1740 = vadd.f32 %v1655, %v1739
        %v1741 = vpop.f32.mrb[0].mxu0
        %v1742 = vpop.f32.mrb[0].mxu0
        %v1743 = vpop.f32.mrb[0].mxu0
        %1744 = vdwg.mxu0
        %1745 = vst [vmem:[%s515] sm:$0xff] %v1740
        %s1746 = sand.u32 %s302, 1
        %s1747 = scalar_lea.sflag [#allocation4], %s1746
        %s1748 = sand.u32 %s302, 1
        %s1749 = smul.addr %s1748, 8
        %s1750 = scalar_lea.vmem [#allocation13], %s1749
        // Predicated region
        $region93: #{tpu_custom_call.1} parent=67 // pred_check
          %p1751 = pneg %p312
        $region94: #{tpu_custom_call.1} parent=67 // pred_check_branch
          %1753 = sbr.rel (%p1751) target = $region96
        $region95: #{tpu_custom_call.1} parent=67 // pred_region
          %s1755 = ssub.s32 128, 128
          %1756 = vsyncadd %s1747, %s1755
          %s1757 = smul.addr %s32, 128
          %s1758 = scalar_lea.hbm %s12, %s1757
          %s1760 = sshll.u32 %s1750, 4
          %s1761 = int_to_ptr.vmem [resolvable:$true] %s1760
          %1763 = dma.vmem_to_hbm [thread:$0]  %s1761, 128, %s1758, %s1747
        $region96: #{tpu_custom_call.1} parent=67 // pred_fallthru
          _
      $region68: #{tpu_custom_call.1} parent=5 // pred_fallthru
        _
      %p1764 = scmp.le.s32.totalorder 2, %s27
      // Predicated region
      $region97: #{tpu_custom_call.1} parent=5 // pred_check
        %p1765 = pneg %p1764
      $region98: #{tpu_custom_call.1} parent=5 // pred_check_branch
        %1767 = sbr.rel (%p1765) target = $region100
      $region99: #{tpu_custom_call.1} parent=5 // pred_region
        %s1768 = ssub.s32 %s27, 2
        // Predicated region
        $region101: #{tpu_custom_call.1} parent=99 // pred_check
          %p1769 = pneg %p318
        $region102: #{tpu_custom_call.1} parent=99 // pred_check_branch
          %1771 = sbr.rel (%p1769) target = $region104
        $region103: #{tpu_custom_call.1} parent=99 // pred_region
          %s1772 = sand.u32 %s303, 1
          %s1773 = scalar_lea.sflag [#allocation4], %s1772
          %s1774 = sand.u32 %s303, 1
          %s1775 = smul.addr %s1774, 8
          %s1776 = scalar_lea.vmem [#allocation13], %s1775
          %1777 = dma.done %s1773, 128
        $region104: #{tpu_custom_call.1} parent=99 // pred_fallthru
          _
      $region100: #{tpu_custom_call.1} parent=5 // pred_fallthru
        _
    $region6: #{tpu_custom_call.1} parent=1 // loop_footer
      %s31 = sadd.s32 1, %s27
    $region7: #{tpu_custom_call.1} parent=1 // loop_footer_branch
      %26 = sbr.rel target = $region3
    $region8: #{tpu_custom_call.1} parent=1 // loop_exit
      _
    %1778 = vsyncpa [#allocation3], 1
    %s1779 = scalar_lea.sflag [#allocation3], 1
    %1780 = vsyncpa %s1779, 1
    %1781 = vsyncpa [#allocation6], 1
    %1782 = vsyncpa [#allocation9], 1
    %1783 = vsyncpa [#allocation12], 1
    %1784 = vsyncpa [#allocation4], 1
    %s1785 = scalar_lea.sflag [#allocation4], 1
    %1786 = vsyncpa %s1785, 1

</llo_original>
